<compile_context>
chip_gen: v7x
topology: tpu7x:2x2x1
jax: 0.10.0
libtpu: 0.0.40
codegen_flags: <defaults>
</compile_context>

<pallas_src>
import functools

import jax
import jax.numpy as jnp
from jax.experimental import pallas as pl
from jax.experimental.pallas import tpu as pltpu


# ----------------------------------------------------------------------------
# Fused Pallas kernel
# ----------------------------------------------------------------------------
def _multimodel_kernel(patch_ref, w_stem_ref, w_head_ref, w_lin_ref, b_ref,
                       out_ref, pooled_acc, feat_acc, *, inv_ohw):
    """Grid = (batch_tile, model, ohw_tile).

    patch_ref : (TB, T_OHW, K)   bf16 im2col patches of one backbone's image tile
    w_stem_ref: (K, C)           bf16 stem conv weight (flattened kh*kw*Cin)
    w_head_ref: (C, F)           bf16 head projection to F=1280 features
    w_lin_ref : (F, NC_pad)      f32 classifier weight (lane-padded)
    b_ref     : (1, NC_pad)      f32 classifier bias   (lane-padded)
    out_ref   : (TB, NC_pad)     f32 logits
    pooled_acc: (TB, C)          f32 running pool sum (per backbone)
    feat_acc  : (TB, F)          f32 running feat1+feat2+feat3 sum
    """
    mi = pl.program_id(1)
    oi = pl.program_id(2)
    n_m = pl.num_programs(1)
    n_o = pl.num_programs(2)

    @pl.when(oi == 0)
    def _():
        pooled_acc[...] = jnp.zeros_like(pooled_acc)

    @pl.when((mi == 0) & (oi == 0))
    def _():
        feat_acc[...] = jnp.zeros_like(feat_acc)

    # --- stem conv (im2col'd) as a single 2-D bf16 matmul on the MXU ------------
    tb, t_ohw, kdim = patch_ref.shape
    p2 = patch_ref[...].reshape(tb * t_ohw, kdim)                    # bf16
    h = jnp.dot(p2, w_stem_ref[...], preferred_element_type=jnp.float32)
    h = h * jax.nn.sigmoid(h)                                        # SiLU in fp32
    # partial global-average-pool: accumulate the sum, divide at finalize
    pooled_acc[...] += jnp.sum(h.reshape(tb, t_ohw, h.shape[-1]), axis=1)

    # --- head projection + SiLU once this backbone's pool is complete -----------
    @pl.when(oi == n_o - 1)
    def _():
        pooled = (pooled_acc[...] * inv_ohw).astype(jnp.bfloat16)    # exact mean
        f = jnp.dot(pooled, w_head_ref[...], preferred_element_type=jnp.float32)
        feat_acc[...] += f * jax.nn.sigmoid(f)                       # sum over backbones

    # --- exact module tail: (feat1 + feat2 + feat3) @ W_lin + b (fp32) ----------
    @pl.when((mi == n_m - 1) & (oi == n_o - 1))
    def _():
        out_ref[...] = (
            jnp.dot(feat_acc[...], w_lin_ref[...], preferred_element_type=jnp.float32)
            + b_ref[...]
        )


# ----------------------------------------------------------------------------
# Wrapper glue
# ----------------------------------------------------------------------------
def _im2col_nhwc(x, kh=3, kw=3, stride=2, pad=1):
    """x: (N, H, W, Cin) -> patches (N, OH*OW, kh*kw*Cin).  Pure slicing glue."""
    n, h, w, c = x.shape
    xp = jnp.pad(x, ((0, 0), (pad, pad), (pad, pad), (0, 0)))
    oh = (h + 2 * pad - kh) // stride + 1
    ow = (w + 2 * pad - kw) // stride + 1
    cols = []
    for i in range(kh):
        for j in range(kw):
            cols.append(xp[:, i:i + stride * oh:stride, j:j + stride * ow:stride, :])
    p = jnp.stack(cols, axis=3)                                      # (N, OH, OW, kh*kw, C)
    return p.reshape(n, oh * ow, kh * kw * c)


def _round_up(x, m):
    return -(-x // m) * m


def _pick_tile(total, target, multiple):
    """Largest divisor of `total` that is <= target and a multiple of `multiple`."""
    if total <= target:
        return total
    for cand in range(target - (target % multiple), multiple - 1, -multiple):
        if cand > 0 and total % cand == 0:
            return cand
    return total


@jax.jit
def multi_model_forward(input1, input2, input3, params):
    """input{1,2,3}: (B, 3, H, W) NCHW (PyTorch convention)."""
    num_classes = params["lin_w"].shape[1]

    imgs = jnp.stack([input1, input2, input3], axis=0)               # (3, B, Cin, H, W)
    n_models, bsz = imgs.shape[0], imgs.shape[1]
    imgs = jnp.transpose(imgs, (0, 1, 3, 4, 2))                      # NHWC per model
    flat = imgs.reshape((n_models * bsz,) + imgs.shape[2:])
    patches = _im2col_nhwc(flat)                                     # (3B, OHW, K)
    ohw, k = patches.shape[1], patches.shape[2]

    k_pad = _round_up(k, 8)
    patches = jnp.pad(patches, ((0, 0), (0, 0), (0, k_pad - k)))
    patches = patches.reshape(n_models, bsz, ohw, k_pad).astype(jnp.bfloat16)

    # Stacked per-backbone weights (bf16 matmul operands, fp32 accumulation in-kernel).
    w_stem = jnp.stack([params["stem1"], params["stem2"], params["stem3"]], axis=0)
    w_stem = jnp.pad(w_stem, ((0, 0), (0, k_pad - k), (0, 0))).astype(jnp.bfloat16)
    w_head = jnp.stack([params["head1"], params["head2"], params["head3"]],
                       axis=0).astype(jnp.bfloat16)
    c_stem = w_stem.shape[-1]
    feat_dim = w_head.shape[-1]

    # Lane-dense classifier (pad num_classes -> multiple of 128, slice back after).
    nc_pad = _round_up(max(num_classes, 128), 128)
    w_lin = jnp.pad(params["lin_w"], ((0, 0), (0, nc_pad - num_classes)))
    b_lin = jnp.pad(params["lin_b"], (0, nc_pad - num_classes)).reshape(1, nc_pad)

    # Tile sizes: small enough for v7x's 64 MiB VMEM (<< 32 MiB scoped default),
    # big enough to amortize per-step overhead on v5e/v6e.
    tb = _pick_tile(bsz, 8, 1)
    t_ohw = _pick_tile(ohw, 2048, 16)
    grid = (bsz // tb, n_models, ohw // t_ohw)

    kernel = functools.partial(_multimodel_kernel, inv_ohw=1.0 / float(ohw))

    out = pl.pallas_call(
        kernel,
        out_shape=jax.ShapeDtypeStruct((bsz, nc_pad), jnp.float32),
        grid_spec=pltpu.PrefetchScalarGridSpec(
            num_scalar_prefetch=0,
            grid=grid,
            in_specs=[
                pl.BlockSpec((pl.Squeezed(), tb, t_ohw, k_pad),
                             lambda bi, mi, oi: (mi, bi, oi, 0)),
                pl.BlockSpec((pl.Squeezed(), k_pad, c_stem),
                             lambda bi, mi, oi: (mi, 0, 0)),
                pl.BlockSpec((pl.Squeezed(), c_stem, feat_dim),
                             lambda bi, mi, oi: (mi, 0, 0)),
                pl.BlockSpec((feat_dim, nc_pad), lambda bi, mi, oi: (0, 0)),
                pl.BlockSpec((1, nc_pad), lambda bi, mi, oi: (0, 0)),
            ],
            out_specs=pl.BlockSpec((tb, nc_pad), lambda bi, mi, oi: (bi, 0)),
            scratch_shapes=[
                pltpu.VMEM((tb, c_stem), jnp.float32),     # pooled sum accumulator
                pltpu.VMEM((tb, feat_dim), jnp.float32),   # feat1+feat2+feat3 accumulator
            ],
        ),
        compiler_params=pltpu.CompilerParams(
            dimension_semantics=("parallel", "arbitrary", "arbitrary")),
    )(patches, w_stem, w_head, w_lin, b_lin)

    return out[:, :num_classes]


def init_params(key, cin=3, stem_c=32, feat_dim=1280, num_classes=10, kh=3, kw=3):
    k = kh * kw * cin
    keys = jax.random.split(key, 8)

    def nrm(kk, shape, fan_in):
        return jax.random.normal(kk, shape, jnp.float32) / jnp.sqrt(float(fan_in))

    return {
        "stem1": nrm(keys[0], (k, stem_c), k),
        "head1": nrm(keys[1], (stem_c, feat_dim), stem_c),
        "stem2": nrm(keys[2], (k, stem_c), k),
        "head2": nrm(keys[3], (stem_c, feat_dim), stem_c),
        "stem3": nrm(keys[4], (k, stem_c), k),
        "head3": nrm(keys[5], (stem_c, feat_dim), stem_c),
        "lin_w": nrm(keys[6], (feat_dim, num_classes), feat_dim),
        "lin_b": nrm(keys[7], (num_classes,), 1),
    }


if __name__ == "__main__":
    B, C, H, W = 2, 3, 16, 16
    NUM_CLASSES = 10

    root = jax.random.PRNGKey(0)
    k_in1, k_in2, k_in3, k_par = jax.random.split(root, 4)
    input1 = jax.random.normal(k_in1, (B, C, H, W), jnp.float32)  # NCHW like PyTorch
    input2 = jax.random.normal(k_in2, (B, C, H, W), jnp.float32)
    input3 = jax.random.normal(k_in3, (B, C, H, W), jnp.float32)
    params = init_params(k_par, num_classes=NUM_CLASSES)

    out = multi_model_forward(input1, input2, input3, params)
    jax.block_until_ready(out)
    assert out.shape == (B, NUM_CLASSES), out.shape
    print("KERNEL_OK")
</pallas_src>

<mosaic_0001>
module attributes {stable_mosaic.version = 11 : i64} {
  func.func @_multimodel_kernel(%arg0: i32, %arg1: i32, %arg2: i32, %arg3: memref<1x2x64x32xbf16, #tpu.memory_space<vmem>>, %arg4: memref<1x32x32xbf16, #tpu.memory_space<vmem>>, %arg5: memref<1x32x1280xbf16, #tpu.memory_space<vmem>>, %arg6: memref<1280x128xf32, #tpu.memory_space<vmem>>, %arg7: memref<1x128xf32, #tpu.memory_space<vmem>>, %arg8: memref<2x128xf32, #tpu.memory_space<vmem>>, %arg9: memref<2x32xf32, #tpu.memory_space<vmem>>, %arg10: memref<2x1280xf32, #tpu.memory_space<vmem>>) attributes {dimension_semantics = [#tpu.dimension_semantics<parallel>, #tpu.dimension_semantics<arbitrary>, #tpu.dimension_semantics<arbitrary>], iteration_bounds = array<i64: 1, 3, 1>, scalar_prefetch = 0 : i64, scratch_operands = 2 : i64, tpu.core_type = #tpu.core_type<tc>, window_params = [{transform_indices = @transform_0, window_bounds = array<i64: 1, 2, 64, 32>}, {transform_indices = @transform_1, window_bounds = array<i64: 1, 32, 32>}, {transform_indices = @transform_2, window_bounds = array<i64: 1, 32, 1280>}, {pipeline_mode = #tpu.pipeline_mode<synchronous>, transform_indices = @transform_3, window_bounds = array<i64: 1280, 128>}, {pipeline_mode = #tpu.pipeline_mode<synchronous>, transform_indices = @transform_4, window_bounds = array<i64: 1, 128>}, {transform_indices = @transform_5, window_bounds = array<i64: 2, 128>}]} {
    %c0_i32 = arith.constant 0 : i32
    %0 = arith.cmpi eq, %arg2, %c0_i32 : i32
    %1 = arith.extui %0 : i1 to i32
    %c0_i32_0 = arith.constant 0 : i32
    %2 = arith.cmpi ne, %1, %c0_i32_0 : i32
    scf.if %2 {
      %cst_20 = arith.constant 0.000000e+00 : f32
      %33 = vector.broadcast %cst_20 : f32 to vector<2x32xf32>
      %c0_21 = arith.constant 0 : index
      %c0_22 = arith.constant 0 : index
      %34 = vector.load %arg9[%c0_21, %c0_22] : memref<2x32xf32, #tpu.memory_space<vmem>>, vector<2x32xf32>
      tpu.vector_store %arg9[%c0_21, %c0_22], %33 {strides = array<i32>} : memref<2x32xf32, #tpu.memory_space<vmem>>, vector<2x32xf32>,
    } else {
    }
    %c0_i32_1 = arith.constant 0 : i32
    %3 = arith.cmpi eq, %arg1, %c0_i32_1 : i32
    %c0_i32_2 = arith.constant 0 : i32
    %4 = arith.cmpi eq, %arg2, %c0_i32_2 : i32
    %5 = arith.andi %3, %4 : i1
    %6 = arith.extui %5 : i1 to i32
    %c0_i32_3 = arith.constant 0 : i32
    %7 = arith.cmpi ne, %6, %c0_i32_3 : i32
    scf.if %7 {
      %cst_20 = arith.constant 0.000000e+00 : f32
      %33 = vector.broadcast %cst_20 : f32 to vector<2x1280xf32>
      %c0_21 = arith.constant 0 : index
      %c0_22 = arith.constant 0 : index
      %34 = vector.load %arg10[%c0_21, %c0_22] : memref<2x1280xf32, #tpu.memory_space<vmem>>, vector<2x1280xf32>
      tpu.vector_store %arg10[%c0_21, %c0_22], %33 {strides = array<i32>} : memref<2x1280xf32, #tpu.memory_space<vmem>>, vector<2x1280xf32>,
    } else {
    }
    %c0 = arith.constant 0 : index
    %c0_4 = arith.constant 0 : index
    %c0_5 = arith.constant 0 : index
    %c0_6 = arith.constant 0 : index
    %8 = vector.load %arg3[%c0, %c0_4, %c0_5, %c0_6] : memref<1x2x64x32xbf16, #tpu.memory_space<vmem>>, vector<1x2x64x32xbf16>
    %9 = vector.shape_cast %8 : vector<1x2x64x32xbf16> to vector<2x64x32xbf16>
    %10 = vector.shape_cast %9 : vector<2x64x32xbf16> to vector<128x32xbf16>
    %c0_7 = arith.constant 0 : index
    %c0_8 = arith.constant 0 : index
    %c0_9 = arith.constant 0 : index
    %11 = vector.load %arg4[%c0_7, %c0_8, %c0_9] : memref<1x32x32xbf16, #tpu.memory_space<vmem>>, vector<1x32x32xbf16>
    %12 = vector.shape_cast %11 : vector<1x32x32xbf16> to vector<32x32xbf16>
    %cst = arith.constant dense<0.000000e+00> : vector<128x32xf32>
    %13 = tpu.matmul %10, %12, %cst {dimension_numbers = #tpu.dot_dimension_numbers<[1], [0], [0], [1], [0, 0, 1, 1], [], []>} : vector<128x32xbf16>, vector<32x32xbf16>, vector<128x32xf32> -> vector<128x32xf32>
    %14 = arith.negf %13 : vector<128x32xf32>
    %15 = math.exp %14 : vector<128x32xf32>
    %cst_10 = arith.constant 1.000000e+00 : f32
    %16 = vector.broadcast %cst_10 : f32 to vector<128x32xf32>
    %17 = arith.addf %16, %15 : vector<128x32xf32>
    %18 = arith.divf %16, %17 : vector<128x32xf32>
    %19 = arith.mulf %13, %18 : vector<128x32xf32>
    %c0_11 = arith.constant 0 : index
    %c0_12 = arith.constant 0 : index
    %20 = vector.load %arg9[%c0_11, %c0_12] : memref<2x32xf32, #tpu.memory_space<vmem>>, vector<2x32xf32>
    %21 = vector.shape_cast %19 : vector<128x32xf32> to vector<2x64x32xf32>
    %cst_13 = arith.constant dense<0.000000e+00> : vector<2x32xf32>
    %22 = vector.multi_reduction <add>, %21, %cst_13 [1] : vector<2x64x32xf32> to vector<2x32xf32>
    %23 = arith.addf %20, %22 : vector<2x32xf32>
    %c0_14 = arith.constant 0 : index
    %c0_15 = arith.constant 0 : index
    %24 = vector.load %arg9[%c0_14, %c0_15] : memref<2x32xf32, #tpu.memory_space<vmem>>, vector<2x32xf32>
    tpu.vector_store %arg9[%c0_14, %c0_15], %23 {strides = array<i32>} : memref<2x32xf32, #tpu.memory_space<vmem>>, vector<2x32xf32>,
    %c0_i32_16 = arith.constant 0 : i32
    %25 = arith.cmpi eq, %arg2, %c0_i32_16 : i32
    %26 = arith.extui %25 : i1 to i32
    %c0_i32_17 = arith.constant 0 : i32
    %27 = arith.cmpi ne, %26, %c0_i32_17 : i32
    scf.if %27 {
      %c0_20 = arith.constant 0 : index
      %c0_21 = arith.constant 0 : index
      %33 = vector.load %arg9[%c0_20, %c0_21] : memref<2x32xf32, #tpu.memory_space<vmem>>, vector<2x32xf32>
      %cst_22 = arith.constant 1.562500e-02 : f32
      %34 = vector.broadcast %cst_22 : f32 to vector<2x32xf32>
      %35 = arith.mulf %33, %34 : vector<2x32xf32>
      %36 = arith.truncf %35 : vector<2x32xf32> to vector<2x32xbf16>
      %c0_23 = arith.constant 0 : index
      %c0_24 = arith.constant 0 : index
      %c0_25 = arith.constant 0 : index
      %37 = vector.load %arg5[%c0_23, %c0_24, %c0_25] : memref<1x32x1280xbf16, #tpu.memory_space<vmem>>, vector<1x32x1280xbf16>
      %38 = vector.shape_cast %37 : vector<1x32x1280xbf16> to vector<32x1280xbf16>
      %cst_26 = arith.constant dense<0.000000e+00> : vector<2x1280xf32>
      %39 = tpu.matmul %36, %38, %cst_26 {dimension_numbers = #tpu.dot_dimension_numbers<[1], [0], [0], [1], [0, 0, 1, 1], [], []>} : vector<2x32xbf16>, vector<32x1280xbf16>, vector<2x1280xf32> -> vector<2x1280xf32>
      %c0_27 = arith.constant 0 : index
      %c0_28 = arith.constant 0 : index
      %40 = vector.load %arg10[%c0_27, %c0_28] : memref<2x1280xf32, #tpu.memory_space<vmem>>, vector<2x1280xf32>
      %41 = arith.negf %39 : vector<2x1280xf32>
      %42 = math.exp %41 : vector<2x1280xf32>
      %cst_29 = arith.constant 1.000000e+00 : f32
      %43 = vector.broadcast %cst_29 : f32 to vector<2x1280xf32>
      %44 = arith.addf %43, %42 : vector<2x1280xf32>
      %45 = arith.divf %43, %44 : vector<2x1280xf32>
      %46 = arith.mulf %39, %45 : vector<2x1280xf32>
      %47 = arith.addf %40, %46 : vector<2x1280xf32>
      %c0_30 = arith.constant 0 : index
      %c0_31 = arith.constant 0 : index
      %48 = vector.load %arg10[%c0_30, %c0_31] : memref<2x1280xf32, #tpu.memory_space<vmem>>, vector<2x1280xf32>
      tpu.vector_store %arg10[%c0_30, %c0_31], %47 {strides = array<i32>} : memref<2x1280xf32, #tpu.memory_space<vmem>>, vector<2x1280xf32>,
    } else {
    }
    %c2_i32 = arith.constant 2 : i32
    %28 = arith.cmpi eq, %arg1, %c2_i32 : i32
    %c0_i32_18 = arith.constant 0 : i32
    %29 = arith.cmpi eq, %arg2, %c0_i32_18 : i32
    %30 = arith.andi %28, %29 : i1
    %31 = arith.extui %30 : i1 to i32
    %c0_i32_19 = arith.constant 0 : i32
    %32 = arith.cmpi ne, %31, %c0_i32_19 : i32
    scf.if %32 {
      %c0_20 = arith.constant 0 : index
      %c0_21 = arith.constant 0 : index
      %33 = vector.load %arg10[%c0_20, %c0_21] : memref<2x1280xf32, #tpu.memory_space<vmem>>, vector<2x1280xf32>
      %c0_22 = arith.constant 0 : index
      %c0_23 = arith.constant 0 : index
      %34 = vector.load %arg6[%c0_22, %c0_23] : memref<1280x128xf32, #tpu.memory_space<vmem>>, vector<1280x128xf32>
      %cst_24 = arith.constant dense<0.000000e+00> : vector<2x128xf32>
      %35 = tpu.matmul %33, %34, %cst_24 {dimension_numbers = #tpu.dot_dimension_numbers<[1], [0], [0], [1], [0, 0, 1, 1], [], []>} : vector<2x1280xf32>, vector<1280x128xf32>, vector<2x128xf32> -> vector<2x128xf32>
      %c0_25 = arith.constant 0 : index
      %c0_26 = arith.constant 0 : index
      %36 = vector.load %arg7[%c0_25, %c0_26] : memref<1x128xf32, #tpu.memory_space<vmem>>, vector<1x128xf32>
      %37 = vector.broadcast %36 : vector<1x128xf32> to vector<2x128xf32>
      %38 = arith.addf %35, %37 : vector<2x128xf32>
      %c0_27 = arith.constant 0 : index
      %c0_28 = arith.constant 0 : index
      %39 = vector.load %arg8[%c0_27, %c0_28] : memref<2x128xf32, #tpu.memory_space<vmem>>, vector<2x128xf32>
      tpu.vector_store %arg8[%c0_27, %c0_28], %38 {strides = array<i32>} : memref<2x128xf32, #tpu.memory_space<vmem>>, vector<2x128xf32>,
    } else {
    }
    return
  }
  func.func @transform_0(%arg0: i32, %arg1: i32, %arg2: i32) -> (i32, i32, i32, i32) {
    %c0_i32 = arith.constant 0 : i32
    %c0_i32_0 = arith.constant 0 : i32
    return %arg1, %arg0, %arg2, %c0_i32 : i32, i32, i32, i32
  }
  func.func @transform_1(%arg0: i32, %arg1: i32, %arg2: i32) -> (i32, i32, i32) {
    %c0_i32 = arith.constant 0 : i32
    %c0_i32_0 = arith.constant 0 : i32
    %c0_i32_1 = arith.constant 0 : i32
    return %arg1, %c0_i32, %c0_i32_0 : i32, i32, i32
  }
  func.func @transform_2(%arg0: i32, %arg1: i32, %arg2: i32) -> (i32, i32, i32) {
    %c0_i32 = arith.constant 0 : i32
    %c0_i32_0 = arith.constant 0 : i32
    %c0_i32_1 = arith.constant 0 : i32
    return %arg1, %c0_i32, %c0_i32_0 : i32, i32, i32
  }
  func.func @transform_3(%arg0: i32, %arg1: i32, %arg2: i32) -> (i32, i32) {
    %c0_i32 = arith.constant 0 : i32
    %c0_i32_0 = arith.constant 0 : i32
    %c0_i32_1 = arith.constant 0 : i32
    return %c0_i32, %c0_i32_0 : i32, i32
  }
  func.func @transform_4(%arg0: i32, %arg1: i32, %arg2: i32) -> (i32, i32) {
    %c0_i32 = arith.constant 0 : i32
    %c0_i32_0 = arith.constant 0 : i32
    %c0_i32_1 = arith.constant 0 : i32
    return %c0_i32, %c0_i32_0 : i32, i32
  }
  func.func @transform_5(%arg0: i32, %arg1: i32, %arg2: i32) -> (i32, i32) {
    %c0_i32 = arith.constant 0 : i32
    %c0_i32_0 = arith.constant 0 : i32
    return %arg0, %c0_i32 : i32, i32
  }
}

</mosaic_0001>

<llo_original>
// kernel: multi_model_forward.1
$region0: #{multi_model_forward.1}
  #allocation0 [shape = 'u32[]', space=smem, size = 0x4, offset = 0x4, fixed_abs, tag = 'smem constant byte address 0x4 - core index']
  #allocation1 [shape = 'u32[144,128]{1,0:T(1,128)}', space=vmem, size = 0x12000, scoped, tag = 'internal scratch']
  #allocation2 [shape = 'f32[2,32]{1,0:T(2,128)}', space=vmem, size = 0x400, scoped, tag = 'scratch operand']
  #allocation3 [shape = 'f32[2,1280]{1,0:T(2,128)}', space=vmem, size = 0x2800, scoped, tag = 'scratch operand']
  %s0 = inlined_call_operand.vmem [shape: bf16[3,2,64,32], index: 0, kind: input, shape index: {}]
  %s1 = inlined_call_operand.vmem [shape: bf16[3,32,32], index: 1, kind: input, shape index: {}]
  %s2 = inlined_call_operand.vmem [shape: bf16[3,32,1280], index: 2, kind: input, shape index: {}]
  %s3 = inlined_call_operand.vmem [shape: f32[1280,128], index: 3, kind: input, shape index: {}]
  %s4 = inlined_call_operand.vmem [shape: f32[1,128], index: 4, kind: input, shape index: {}]
  %s5 = inlined_call_operand.hbm [shape: f32[2,128], index: 5, kind: output, shape index: {}]
  %s6 = sld [smem:[#allocation0]]
  $region69: #{multi_model_forward.1} parent=0
    _
  %s8 = ssub.s32 1, %s6
  %s9 = scalar_select 0, %s8, %s6
  $region1: #{multi_model_forward.1} parent=0
    #allocation4 [shape = 'u8[1024]{0}', space=vmem, size = 0x400, scoped, tag = 'output window, operand 0, single buffered']
    #allocation5 [shape = 's32[2]{0}', space=sflag, size = 0x8, scoped, tag = 'scoped memory for multi_model_forward.1']
    %10 = vsyncpa [#allocation5], 0
    loop: start=0, step=1, limit=5
    $region2: #{multi_model_forward.1} parent=1 // loop_pre_header
      _
    $region3: #{multi_model_forward.1} parent=1 // loop_header
      %s12 = sphi 0, %s16
      %p13 = scmp.ge.s32.totalorder %s12, 5
      %s19 = sphi 0, %s38
      %s20 = sphi 0, %s34
      %s21 = sphi 0, %s30
      %s22 = sphi 0, %s19
      %s23 = sphi 0, %s20
      %s24 = sphi 0, %s21
      %s25 = sphi 0, %s22
      %s26 = sphi 0, %s23
      %s27 = sphi 0, %s24
      %s45 = sphi 0, %s47
      %s48 = sphi 0, %s45
      %s49 = sphi 0, %s48
      %s65 = sphi 0, %s49
      %s71 = sphi 0, %s73
      %s74 = sphi 0, %s71
      %s75 = sphi 0, %s74
      %s91 = sphi 0, %s75
      %s97 = sphi 0, %s99
      %s100 = sphi 0, %s97
      %s101 = sphi 0, %s100
      %s117 = sphi 0, %s101
      %s121 = sphi 0, %s121
      %s123 = sphi 0, %s121
      %s124 = sphi 0, %s123
      %s138 = sphi 0, %s124
      %s142 = sphi 0, %s142
      %s144 = sphi 0, %s142
      %s145 = sphi 0, %s144
      %s159 = sphi 0, %s145
      %s165 = sphi 0, %s167
      %s168 = sphi 0, %s165
      %s169 = sphi 0, %s168
      %s185 = sphi 0, %s169
    $region4: #{multi_model_forward.1} parent=1 // loop_header_branch
      %15 = sbr.rel (%p13) target = $region8
    $region5: #{multi_model_forward.1} parent=1 // loop_body
      %s17 = ssub.s32 %s12, 1
      %s18 = ssub.s32 %s12, 2
      %s28 = sadd.s32 1, %s21
      %p29 = scmp.ge.s32.totalorder %s28, 1
      %s30 = scalar_select %p29, 0, %s28
      %s31 = sadd.s32 1, %s20
      %s32 = scalar_select %p29, %s31, %s20
      %p33 = scmp.ge.s32.totalorder %s32, 3
      %s34 = scalar_select %p33, 0, %s32
      %s35 = sadd.s32 1, %s19
      %s36 = scalar_select %p33, %s35, %s19
      %p37 = scmp.ge.s32.totalorder %s36, 1
      %s38 = scalar_select %p37, 0, %s36
      %s39 = ssub.s32 %s20, %s34
      %s40 = ssub.s32 %s19, %s38
      %s41 = sor.u32 %s39, %s40
      %s42 = ssub.s32 %s21, %s30
      %s43 = sor.u32 %s41, %s42
      %p44 = scmp.eq.s32.totalorder %s43, 0
      %s46 = sadd.s32 %s45, 1
      %s47 = scalar_select %p44, %s45, %s46
      %p50 = pneg %p44
      %p51 = scmp.eq.s32.totalorder %s12, 2
      %p52 = por %p50, %p51
      %p53 = scmp.ne.s32.totalorder %s45, %s48
      %p54 = scmp.eq.s32.totalorder %s12, 0
      %p55 = por %p53, %p54
      %p56 = scmp.ne.s32.totalorder %s45, %s48
      %p57 = scmp.eq.s32.totalorder %s17, 2
      %p58 = por %p56, %p57
      %p59 = scmp.ne.s32.totalorder %s48, %s49
      %p60 = scmp.eq.s32.totalorder %s17, 0
      %p61 = por %p59, %p60
      %p62 = scmp.ne.s32.totalorder %s48, %s49
      %p63 = scmp.eq.s32.totalorder %s18, 2
      %p64 = por %p62, %p63
      %p66 = scmp.ne.s32.totalorder %s49, %s65
      %p67 = scmp.eq.s32.totalorder %s18, 0
      %p68 = por %p66, %p67
      %s69 = ssub.s32 %s20, %s34
      %p70 = scmp.eq.s32.totalorder %s69, 0
      %s72 = sadd.s32 %s71, 1
      %s73 = scalar_select %p70, %s71, %s72
      %p76 = pneg %p70
      %p77 = scmp.eq.s32.totalorder %s12, 2
      %p78 = por %p76, %p77
      %p79 = scmp.ne.s32.totalorder %s71, %s74
      %p80 = scmp.eq.s32.totalorder %s12, 0
      %p81 = por %p79, %p80
      %p82 = scmp.ne.s32.totalorder %s71, %s74
      %p83 = scmp.eq.s32.totalorder %s17, 2
      %p84 = por %p82, %p83
      %p85 = scmp.ne.s32.totalorder %s74, %s75
      %p86 = scmp.eq.s32.totalorder %s17, 0
      %p87 = por %p85, %p86
      %p88 = scmp.ne.s32.totalorder %s74, %s75
      %p89 = scmp.eq.s32.totalorder %s18, 2
      %p90 = por %p88, %p89
      %p92 = scmp.ne.s32.totalorder %s75, %s91
      %p93 = scmp.eq.s32.totalorder %s18, 0
      %p94 = por %p92, %p93
      %s95 = ssub.s32 %s20, %s34
      %p96 = scmp.eq.s32.totalorder %s95, 0
      %s98 = sadd.s32 %s97, 1
      %s99 = scalar_select %p96, %s97, %s98
      %p102 = pneg %p96
      %p103 = scmp.eq.s32.totalorder %s12, 2
      %p104 = por %p102, %p103
      %p105 = scmp.ne.s32.totalorder %s97, %s100
      %p106 = scmp.eq.s32.totalorder %s12, 0
      %p107 = por %p105, %p106
      %p108 = scmp.ne.s32.totalorder %s97, %s100
      %p109 = scmp.eq.s32.totalorder %s17, 2
      %p110 = por %p108, %p109
      %p111 = scmp.ne.s32.totalorder %s100, %s101
      %p112 = scmp.eq.s32.totalorder %s17, 0
      %p113 = por %p111, %p112
      %p114 = scmp.ne.s32.totalorder %s100, %s101
      %p115 = scmp.eq.s32.totalorder %s18, 2
      %p116 = por %p114, %p115
      %p118 = scmp.ne.s32.totalorder %s101, %s117
      %p119 = scmp.eq.s32.totalorder %s18, 0
      %p120 = por %p118, %p119
      %s122 = sadd.s32 %s121, 1
      %p125 = scmp.eq.s32.totalorder %s12, 2
      %p126 = scmp.ne.s32.totalorder %s121, %s123
      %p127 = scmp.eq.s32.totalorder %s12, 0
      %p128 = por %p126, %p127
      %p129 = scmp.ne.s32.totalorder %s121, %s123
      %p130 = scmp.eq.s32.totalorder %s17, 2
      %p131 = por %p129, %p130
      %p132 = scmp.ne.s32.totalorder %s123, %s124
      %p133 = scmp.eq.s32.totalorder %s17, 0
      %p134 = por %p132, %p133
      %p135 = scmp.ne.s32.totalorder %s123, %s124
      %p136 = scmp.eq.s32.totalorder %s18, 2
      %p137 = por %p135, %p136
      %p139 = scmp.ne.s32.totalorder %s124, %s138
      %p140 = scmp.eq.s32.totalorder %s18, 0
      %p141 = por %p139, %p140
      %s143 = sadd.s32 %s142, 1
      %p146 = scmp.eq.s32.totalorder %s12, 2
      %p147 = scmp.ne.s32.totalorder %s142, %s144
      %p148 = scmp.eq.s32.totalorder %s12, 0
      %p149 = por %p147, %p148
      %p150 = scmp.ne.s32.totalorder %s142, %s144
      %p151 = scmp.eq.s32.totalorder %s17, 2
      %p152 = por %p150, %p151
      %p153 = scmp.ne.s32.totalorder %s144, %s145
      %p154 = scmp.eq.s32.totalorder %s17, 0
      %p155 = por %p153, %p154
      %p156 = scmp.ne.s32.totalorder %s144, %s145
      %p157 = scmp.eq.s32.totalorder %s18, 2
      %p158 = por %p156, %p157
      %p160 = scmp.ne.s32.totalorder %s145, %s159
      %p161 = scmp.eq.s32.totalorder %s18, 0
      %p162 = por %p160, %p161
      %s163 = ssub.s32 %s19, %s38
      %p164 = scmp.eq.s32.totalorder %s163, 0
      %s166 = sadd.s32 %s165, 1
      %s167 = scalar_select %p164, %s165, %s166
      %p170 = pneg %p164
      %p171 = scmp.eq.s32.totalorder %s12, 2
      %p172 = por %p170, %p171
      %p173 = scmp.ne.s32.totalorder %s165, %s168
      %p174 = scmp.eq.s32.totalorder %s12, 0
      %p175 = por %p173, %p174
      %p176 = scmp.ne.s32.totalorder %s165, %s168
      %p177 = scmp.eq.s32.totalorder %s17, 2
      %p178 = por %p176, %p177
      %p179 = scmp.ne.s32.totalorder %s168, %s169
      %p180 = scmp.eq.s32.totalorder %s17, 0
      %p181 = por %p179, %p180
      %p182 = scmp.ne.s32.totalorder %s168, %s169
      %p183 = scmp.eq.s32.totalorder %s18, 2
      %p184 = por %p182, %p183
      %p186 = scmp.ne.s32.totalorder %s169, %s185
      %p187 = scmp.eq.s32.totalorder %s18, 0
      %p188 = por %p186, %p187
      %p189 = scmp.le.s32.totalorder 1, %s12
      %p190 = scmp.lt.s32.totalorder %s12, 4
      %p191 = pnand %p189, %p190
      %p192 = pneg %p191
      // Predicated region
      $region9: #{multi_model_forward.1} parent=5 // pred_check
        _
      $region10: #{multi_model_forward.1} parent=5 // pred_check_branch
        %194 = sbr.rel (%p191) target = $region12
      $region11: #{multi_model_forward.1} parent=5 // pred_region
        %s195 = ssub.s32 %s12, 1
        // Predicated region
        $region13: #{multi_model_forward.1} parent=11 // pred_check
          %p196 = pneg %p134
        $region14: #{multi_model_forward.1} parent=11 // pred_check_branch
          %198 = sbr.rel (%p196) target = $region16
        $region15: #{multi_model_forward.1} parent=11 // pred_region
          _
        $region16: #{multi_model_forward.1} parent=11 // pred_fallthru
          _
        // Predicated region
        $region17: #{multi_model_forward.1} parent=11 // pred_check
          %p199 = pneg %p155
        $region18: #{multi_model_forward.1} parent=11 // pred_check_branch
          %201 = sbr.rel (%p199) target = $region20
        $region19: #{multi_model_forward.1} parent=11 // pred_region
          _
        $region20: #{multi_model_forward.1} parent=11 // pred_fallthru
          _
      $region12: #{multi_model_forward.1} parent=5 // pred_fallthru
        _
      %p202 = scmp.lt.s32.totalorder %s12, 3
      // Predicated region
      $region21: #{multi_model_forward.1} parent=5 // pred_check
        %p203 = pneg %p202
      $region22: #{multi_model_forward.1} parent=5 // pred_check_branch
        %205 = sbr.rel (%p203) target = $region24
      $region23: #{multi_model_forward.1} parent=5 // pred_region
        // Predicated region
        $region25: #{multi_model_forward.1} parent=23 // pred_check
          %p206 = pneg %p55
        $region26: #{multi_model_forward.1} parent=23 // pred_check_branch
          %208 = sbr.rel (%p206) target = $region28
        $region27: #{multi_model_forward.1} parent=23 // pred_region
          %s209 = smul.u32 2, %s19
          %s210 = smul.u32 8, %s21
          %p211 = scmp.lt.s32.totalorder %s20, 2
          %s212 = scalar_select %p211, %s20, 2
          %p213 = scmp.lt.s32.totalorder %s209, 1
          %s214 = scalar_select %p213, %s209, 1
          %p215 = scmp.lt.s32.totalorder %s210, 7
          %s216 = scalar_select %p215, %s210, 7
          %s217 = smul.addr %s214, 8
          %s218 = sadd.s32 %s216, %s217
          %s219 = smul.addr %s212, 16
          %s220 = sadd.s32 %s218, %s219
          %s221 = smul.addr %s220, 4
          %s222 = scalar_lea.vmem %s0, %s221
          %s223 = smul.u32 2, %s19
          %s224 = smul.u32 8, %s21
        $region28: #{multi_model_forward.1} parent=23 // pred_fallthru
          _
        // Predicated region
        $region29: #{multi_model_forward.1} parent=23 // pred_check
          %p225 = pneg %p81
        $region30: #{multi_model_forward.1} parent=23 // pred_check_branch
          %227 = sbr.rel (%p225) target = $region32
        $region31: #{multi_model_forward.1} parent=23 // pred_region
          %p228 = scmp.lt.s32.totalorder %s20, 2
          %s229 = scalar_select %p228, %s20, 2
          %s230 = smul.addr %s229, 4
          %s231 = smul.addr %s230, 4
          %s232 = scalar_lea.vmem %s1, %s231
        $region32: #{multi_model_forward.1} parent=23 // pred_fallthru
          _
        // Predicated region
        $region33: #{multi_model_forward.1} parent=23 // pred_check
          %p233 = pneg %p107
        $region34: #{multi_model_forward.1} parent=23 // pred_check_branch
          %235 = sbr.rel (%p233) target = $region36
        $region35: #{multi_model_forward.1} parent=23 // pred_region
          %p236 = scmp.lt.s32.totalorder %s20, 2
          %s237 = scalar_select %p236, %s20, 2
          %s238 = smul.addr %s237, 40
          %s239 = smul.addr %s238, 4
          %s240 = scalar_lea.vmem %s2, %s239
        $region36: #{multi_model_forward.1} parent=23 // pred_fallthru
          _
      $region24: #{multi_model_forward.1} parent=5 // pred_fallthru
        _
      %p241 = scmp.le.s32.totalorder 1, %s12
      %p242 = scmp.lt.s32.totalorder %s12, 4
      %p243 = pnand %p241, %p242
      %p244 = pneg %p243
      // Predicated region
      $region37: #{multi_model_forward.1} parent=5 // pred_check
        _
      $region38: #{multi_model_forward.1} parent=5 // pred_check_branch
        %246 = sbr.rel (%p243) target = $region40
      $region39: #{multi_model_forward.1} parent=5 // pred_region
        %s247 = ssub.s32 %s12, 1
        %s248 = smul.u32 2, %s22
        %s249 = smul.u32 8, %s24
        %p250 = scmp.lt.s32.totalorder %s23, 2
        %s251 = scalar_select %p250, %s23, 2
        %p252 = scmp.lt.s32.totalorder %s248, 1
        %s253 = scalar_select %p252, %s248, 1
        %p254 = scmp.lt.s32.totalorder %s249, 7
        %s255 = scalar_select %p254, %s249, 7
        %s256 = smul.addr %s253, 8
        %s257 = sadd.s32 %s255, %s256
        %s258 = smul.addr %s251, 16
        %s259 = sadd.s32 %s257, %s258
        %s260 = smul.addr %s259, 4
        %s261 = scalar_lea.vmem %s0, %s260
        %p262 = pneg %p61
        %p263 = pneg %p58
        %p264 = scmp.lt.s32.totalorder %s23, 2
        %s265 = scalar_select %p264, %s23, 2
        %s266 = smul.addr %s265, 4
        %s267 = smul.addr %s266, 4
        %s268 = scalar_lea.vmem %s1, %s267
        %p269 = pneg %p87
        %p270 = pneg %p84
        %p271 = scmp.lt.s32.totalorder %s23, 2
        %s272 = scalar_select %p271, %s23, 2
        %s273 = smul.addr %s272, 40
        %s274 = smul.addr %s273, 4
        %s275 = scalar_lea.vmem %s2, %s274
        %p276 = pneg %p113
        %p277 = pneg %p110
        %p278 = pneg %p134
        %p279 = pneg %p131
        %p280 = pneg %p155
        %p281 = pneg %p152
        %p282 = pneg %p181
        %p283 = pneg %p178
        %s284 = smul.u32 2, %s22
        %s285 = smul.u32 8, %s24
        %p286 = scmp.lt.s32.totalorder %s23, 2
        %s287 = scalar_select %p286, %s23, 2
        %p288 = scmp.lt.s32.totalorder %s284, 1
        %s289 = scalar_select %p288, %s284, 1
        %p290 = scmp.lt.s32.totalorder %s285, 7
        %s291 = scalar_select %p290, %s285, 7
        %s292 = smul.addr %s289, 8
        %s293 = sadd.s32 %s291, %s292
        %s294 = smul.addr %s287, 16
        %s295 = sadd.s32 %s293, %s294
        %s296 = smul.addr %s295, 4
        %s297 = scalar_lea.vmem %s0, %s296
        %s298 = smul.u32 2, %s22
        %s299 = smul.u32 8, %s24
        %p300 = scmp.lt.s32.totalorder %s23, 2
        %s301 = scalar_select %p300, %s23, 2
        %s302 = smul.addr %s301, 4
        %s303 = smul.addr %s302, 4
        %s304 = scalar_lea.vmem %s1, %s303
        %p305 = scmp.lt.s32.totalorder %s23, 2
        %s306 = scalar_select %p305, %s23, 2
        %s307 = smul.addr %s306, 40
        %s308 = smul.addr %s307, 4
        %s309 = scalar_lea.vmem %s2, %s308
        %p311 = scmp.eq.s32.totalorder %s24, 0
        // Predicated region
        $region41: #{multi_model_forward.1} parent=39 // pred_check
          %p312 = pneg %p311
        $region42: #{multi_model_forward.1} parent=39 // pred_check_branch
          %314 = sbr.rel (%p312) target = $region44
        $region43: #{multi_model_forward.1} parent=39 // pred_region
          %vm315 = vcmask 254976
          %316 = vst.msk [vmem:[#allocation2] sm:$0x3] %vm315, 0.0
        $region44: #{multi_model_forward.1} parent=39 // pred_fallthru
          _
        %p317 = scmp.eq.s32.totalorder %s23, 0
        %p318 = pnand %p317, %p311
        %p319 = pneg %p318
        // Predicated region
        $region45: #{multi_model_forward.1} parent=39 // pred_check
          _
        $region46: #{multi_model_forward.1} parent=39 // pred_check_branch
          %321 = sbr.rel (%p318) target = $region48
        $region47: #{multi_model_forward.1} parent=39 // pred_region
          %322 = vst [vmem:[#allocation3] sm:$0xff] 0.0
          %323 = vst [vmem:[#allocation3 + $0x8] sm:$0xff] 0.0
          %324 = vst [vmem:[#allocation3 + $0x10] sm:$0xf] 0.0
        $region48: #{multi_model_forward.1} parent=39 // pred_fallthru
          _
        %v325 = vld [vmem:[%s297] sm:$0xf]
        %v326 = vld [vmem:[%s297 + $0x4] sm:$0xf]
        %v327 = vld [vmem:[%s297 + $0x8] sm:$0xf]
        %v328 = vld [vmem:[%s297 + $0xc] sm:$0xf]
        %v329 = vld [vmem:[%s297 + $0x10] sm:$0xf]
        %v330 = vld [vmem:[%s297 + $0x14] sm:$0xf]
        %v331 = vld [vmem:[%s297 + $0x18] sm:$0xf]
        %v332 = vld [vmem:[%s297 + $0x1c] sm:$0xf]
        %v333 = vld [vmem:[%s297 + $0x20] sm:$0xf]
        %v334 = vld [vmem:[%s297 + $0x24] sm:$0xf]
        %v335 = vld [vmem:[%s297 + $0x28] sm:$0xf]
        %v336 = vld [vmem:[%s297 + $0x2c] sm:$0xf]
        %v337 = vld [vmem:[%s297 + $0x30] sm:$0xf]
        %v338 = vld [vmem:[%s297 + $0x34] sm:$0xf]
        %v339 = vld [vmem:[%s297 + $0x38] sm:$0xf]
        %v340 = vld [vmem:[%s297 + $0x3c] sm:$0xf]
        %v341 = vld [vmem:[%s304] sm:$0xf]
        %v342 = vld [vmem:[%s304 + $0x4] sm:$0xf]
        %v343 = vld [vmem:[%s304 + $0x8] sm:$0xf]
        %v344 = vld [vmem:[%s304 + $0xc] sm:$0xf]
        %v361 = vunpack.c.l.b16 %v325
        %v362 = vunpack.c.l.b16 %v326
        %v363 = vunpack.c.l.b16 %v327
        %v364 = vunpack.c.l.b16 %v328
        %v365 = vunpack.c.l.b16 %v329
        %v366 = vunpack.c.l.b16 %v330
        %v367 = vunpack.c.l.b16 %v331
        %v368 = vunpack.c.l.b16 %v332
        %v369 = vunpack.c.l.b16 %v333
        %v370 = vunpack.c.l.b16 %v334
        %v371 = vunpack.c.l.b16 %v335
        %v372 = vunpack.c.l.b16 %v336
        %v373 = vunpack.c.l.b16 %v337
        %v374 = vunpack.c.l.b16 %v338
        %v375 = vunpack.c.l.b16 %v339
        %v376 = vunpack.c.l.b16 %v340
        %v377 = vpack.c.b16 %v362, %v361
        %v378 = vpack.c.b16 %v364, %v363
        %v379 = vpack.c.b16 %v366, %v365
        %v380 = vpack.c.b16 %v368, %v367
        %v381 = vpack.c.b16 %v370, %v369
        %v382 = vpack.c.b16 %v372, %v371
        %v383 = vpack.c.b16 %v374, %v373
        %v384 = vpack.c.b16 %v376, %v375
        %v389 = vunpack.c.l.b16 %v341
        %v390 = vunpack.c.l.b16 %v342
        %v391 = vunpack.c.l.b16 %v343
        %v392 = vunpack.c.l.b16 %v344
        %v393 = vpack.c.b16 %v390, %v389
        %v394 = vpack.c.b16 %v392, %v391
        %vm397 = vcmask 261120
        %v399 = vsel %vm397, %v377, 0
        %v402 = vsel %vm397, %v378, 0
        %v405 = vsel %vm397, %v379, 0
        %v408 = vsel %vm397, %v380, 0
        %v411 = vsel %vm397, %v381, 0
        %v414 = vsel %vm397, %v382, 0
        %v417 = vsel %vm397, %v383, 0
        %v420 = vsel %vm397, %v384, 0
        %422 = vmatprep.subr.bf16.mxu0 0
        %423 = vmatpush1.bf16.msra.mxu0 %v393
        %424 = vmatprep.subr.bf16.mxu0 0
        %425 = vmatpush1.bf16.msra.mxu0 %v394
        %426 = vmatprep.subr.bf16.mxu0 0
        %427 = vmatpush1.bf16.msra.mxu0 0
        %428 = vmatprep.subr.bf16.mxu0 0
        %429 = vmatpush1.bf16.msra.mxu0 0
        %430 = vmatprep.subr.bf16.mxu0 0
        %431 = vmatpush1.bf16.msra.mxu0 0
        %432 = vmatprep.subr.bf16.mxu0 0
        %433 = vmatpush1.bf16.msra.mxu0 0
        %434 = vmatprep.subr.bf16.mxu0 0
        %435 = vmatpush1.bf16.msra.mxu0 0
        %436 = vmatprep.subr.bf16.mxu0 0
        %437 = vmatpush1.bf16.msra.mxu0 0
        %438 = vmatprep.subr.bf16.mxu0 0
        %439 = vmatpush1.bf16.msra.mxu0 0
        %440 = vmatprep.subr.bf16.mxu0 0
        %441 = vmatpush1.bf16.msra.mxu0 0
        %442 = vmatprep.subr.bf16.mxu0 0
        %443 = vmatpush1.bf16.msra.mxu0 0
        %444 = vmatprep.subr.bf16.mxu0 0
        %445 = vmatpush1.bf16.msra.mxu0 0
        %446 = vmatprep.subr.bf16.mxu0 0
        %447 = vmatpush1.bf16.msra.mxu0 0
        %448 = vmatprep.subr.bf16.mxu0 0
        %449 = vmatpush1.bf16.msra.mxu0 0
        %450 = vmatprep.subr.bf16.mxu0 0
        %451 = vmatpush1.bf16.msra.mxu0 0
        %452 = vmatprep.subr.bf16.mxu0 0
        %453 = vmatpush1.bf16.msra.mxu0 0
        %454 = vmatprep.mubr.bf16.mxu0 0
        %455 = vmatmul.mubr.bf16.gmra.mrb[0].mxu0 %v399
        %v456 = vpop.f32.mrb[0].mxu0
        %v457 = vadd.f32 0.0, %v456
        %v458 = vpop.f32.mrb[0].mxu0
        %v459 = vpop.f32.mrb[0].mxu0
        %v460 = vadd.f32 0.0, %v459
        %v461 = vpop.f32.mrb[0].mxu0
        %462 = vmatprep.mubr.bf16.mxu0 0
        %463 = vmatmul.mubr.bf16.gmra.mrb[0].mxu0 %v402
        %v464 = vpop.f32.mrb[0].mxu0
        %v465 = vadd.f32 0.0, %v464
        %v466 = vpop.f32.mrb[0].mxu0
        %v467 = vpop.f32.mrb[0].mxu0
        %v468 = vadd.f32 0.0, %v467
        %v469 = vpop.f32.mrb[0].mxu0
        %470 = vmatprep.mubr.bf16.mxu0 0
        %471 = vmatmul.mubr.bf16.gmra.mrb[0].mxu0 %v405
        %v472 = vpop.f32.mrb[0].mxu0
        %v473 = vadd.f32 0.0, %v472
        %v474 = vpop.f32.mrb[0].mxu0
        %v475 = vpop.f32.mrb[0].mxu0
        %v476 = vadd.f32 0.0, %v475
        %v477 = vpop.f32.mrb[0].mxu0
        %478 = vmatprep.mubr.bf16.mxu0 0
        %479 = vmatmul.mubr.bf16.gmra.mrb[0].mxu0 %v408
        %v480 = vpop.f32.mrb[0].mxu0
        %v481 = vadd.f32 0.0, %v480
        %v482 = vpop.f32.mrb[0].mxu0
        %v483 = vpop.f32.mrb[0].mxu0
        %v484 = vadd.f32 0.0, %v483
        %v485 = vpop.f32.mrb[0].mxu0
        %486 = vmatprep.mubr.bf16.mxu0 0
        %487 = vmatmul.mubr.bf16.gmra.mrb[0].mxu0 %v411
        %v488 = vpop.f32.mrb[0].mxu0
        %v489 = vadd.f32 0.0, %v488
        %v490 = vpop.f32.mrb[0].mxu0
        %v491 = vpop.f32.mrb[0].mxu0
        %v492 = vadd.f32 0.0, %v491
        %v493 = vpop.f32.mrb[0].mxu0
        %494 = vmatprep.mubr.bf16.mxu0 0
        %495 = vmatmul.mubr.bf16.gmra.mrb[0].mxu0 %v414
        %v496 = vpop.f32.mrb[0].mxu0
        %v497 = vadd.f32 0.0, %v496
        %v498 = vpop.f32.mrb[0].mxu0
        %v499 = vpop.f32.mrb[0].mxu0
        %v500 = vadd.f32 0.0, %v499
        %v501 = vpop.f32.mrb[0].mxu0
        %502 = vmatprep.mubr.bf16.mxu0 0
        %503 = vmatmul.mubr.bf16.gmra.mrb[0].mxu0 %v417
        %v504 = vpop.f32.mrb[0].mxu0
        %v505 = vadd.f32 0.0, %v504
        %v506 = vpop.f32.mrb[0].mxu0
        %v507 = vpop.f32.mrb[0].mxu0
        %v508 = vadd.f32 0.0, %v507
        %v509 = vpop.f32.mrb[0].mxu0
        %510 = vmatprep.mubr.bf16.mxu0 0
        %511 = vmatmul.mubr.bf16.gmra.mrb[0].mxu0 %v420
        %v512 = vpop.f32.mrb[0].mxu0
        %v513 = vadd.f32 0.0, %v512
        %v514 = vpop.f32.mrb[0].mxu0
        %v515 = vpop.f32.mrb[0].mxu0
        %v516 = vadd.f32 0.0, %v515
        %v517 = vpop.f32.mrb[0].mxu0
        %518 = vdwg.mxu0
        %v519 = vxor.u32 %v457, 2147483648
        %v520 = vxor.u32 %v460, 2147483648
        %v521 = vxor.u32 %v465, 2147483648
        %v522 = vxor.u32 %v468, 2147483648
        %v523 = vxor.u32 %v473, 2147483648
        %v524 = vxor.u32 %v476, 2147483648
        %v525 = vxor.u32 %v481, 2147483648
        %v526 = vxor.u32 %v484, 2147483648
        %v527 = vxor.u32 %v489, 2147483648
        %v528 = vxor.u32 %v492, 2147483648
        %v529 = vxor.u32 %v497, 2147483648
        %v530 = vxor.u32 %v500, 2147483648
        %v531 = vxor.u32 %v505, 2147483648
        %v532 = vxor.u32 %v508, 2147483648
        %v533 = vxor.u32 %v513, 2147483648
        %v534 = vxor.u32 %v516, 2147483648
        %v535 = vmul.f32 %v519, 1.442695
        %v536 = vpow.pop %v535
        %v537 = vmul.f32 %v520, 1.442695
        %v538 = vpow.pop %v537
        %v539 = vmul.f32 %v521, 1.442695
        %v540 = vpow.pop %v539
        %v541 = vmul.f32 %v522, 1.442695
        %v542 = vpow.pop %v541
        %v543 = vmul.f32 %v523, 1.442695
        %v544 = vpow.pop %v543
        %v545 = vmul.f32 %v524, 1.442695
        %v546 = vpow.pop %v545
        %v547 = vmul.f32 %v525, 1.442695
        %v548 = vpow.pop %v547
        %v549 = vmul.f32 %v526, 1.442695
        %v550 = vpow.pop %v549
        %v551 = vmul.f32 %v527, 1.442695
        %v552 = vpow.pop %v551
        %v553 = vmul.f32 %v528, 1.442695
        %v554 = vpow.pop %v553
        %v555 = vmul.f32 %v529, 1.442695
        %v556 = vpow.pop %v555
        %v557 = vmul.f32 %v530, 1.442695
        %v558 = vpow.pop %v557
        %v559 = vmul.f32 %v531, 1.442695
        %v560 = vpow.pop %v559
        %v561 = vmul.f32 %v532, 1.442695
        %v562 = vpow.pop %v561
        %v563 = vmul.f32 %v533, 1.442695
        %v564 = vpow.pop %v563
        %v565 = vmul.f32 %v534, 1.442695
        %v566 = vpow.pop %v565
        %v567 = vadd.f32 %v536, 1.0
        %v568 = vadd.f32 %v538, 1.0
        %v569 = vadd.f32 %v540, 1.0
        %v570 = vadd.f32 %v542, 1.0
        %v571 = vadd.f32 %v544, 1.0
        %v572 = vadd.f32 %v546, 1.0
        %v573 = vadd.f32 %v548, 1.0
        %v574 = vadd.f32 %v550, 1.0
        %v575 = vadd.f32 %v552, 1.0
        %v576 = vadd.f32 %v554, 1.0
        %v577 = vadd.f32 %v556, 1.0
        %v578 = vadd.f32 %v558, 1.0
        %v579 = vadd.f32 %v560, 1.0
        %v580 = vadd.f32 %v562, 1.0
        %v581 = vadd.f32 %v564, 1.0
        %v582 = vadd.f32 %v566, 1.0
        %v583 = vrcp.pop %v567
        %v584 = vmul.f32 1.0, %v583
        %v585 = vrcp.pop %v568
        %v586 = vmul.f32 1.0, %v585
        %v587 = vrcp.pop %v569
        %v588 = vmul.f32 1.0, %v587
        %v589 = vrcp.pop %v570
        %v590 = vmul.f32 1.0, %v589
        %v591 = vrcp.pop %v571
        %v592 = vmul.f32 1.0, %v591
        %v593 = vrcp.pop %v572
        %v594 = vmul.f32 1.0, %v593
        %v595 = vrcp.pop %v573
        %v596 = vmul.f32 1.0, %v595
        %v597 = vrcp.pop %v574
        %v598 = vmul.f32 1.0, %v597
        %v599 = vrcp.pop %v575
        %v600 = vmul.f32 1.0, %v599
        %v601 = vrcp.pop %v576
        %v602 = vmul.f32 1.0, %v601
        %v603 = vrcp.pop %v577
        %v604 = vmul.f32 1.0, %v603
        %v605 = vrcp.pop %v578
        %v606 = vmul.f32 1.0, %v605
        %v607 = vrcp.pop %v579
        %v608 = vmul.f32 1.0, %v607
        %v609 = vrcp.pop %v580
        %v610 = vmul.f32 1.0, %v609
        %v611 = vrcp.pop %v581
        %v612 = vmul.f32 1.0, %v611
        %v613 = vrcp.pop %v582
        %v614 = vmul.f32 1.0, %v613
        %v615 = vmul.f32 %v457, %v584
        %v616 = vmul.f32 %v460, %v586
        %v617 = vmul.f32 %v465, %v588
        %v618 = vmul.f32 %v468, %v590
        %v619 = vmul.f32 %v473, %v592
        %v620 = vmul.f32 %v476, %v594
        %v621 = vmul.f32 %v481, %v596
        %v622 = vmul.f32 %v484, %v598
        %v623 = vmul.f32 %v489, %v600
        %v624 = vmul.f32 %v492, %v602
        %v625 = vmul.f32 %v497, %v604
        %v626 = vmul.f32 %v500, %v606
        %v627 = vmul.f32 %v505, %v608
        %v628 = vmul.f32 %v508, %v610
        %v629 = vmul.f32 %v513, %v612
        %v630 = vmul.f32 %v516, %v614
        %v631 = vld [vmem:[#allocation2] sm:$0x3]
        %v632 = vsel %vm397, %v615, 0.0
        %v633 = vsel %vm397, %v616, 0.0
        %v634 = vadd.f32 %v632, %v633
        %v635 = vsel %vm397, %v617, 0.0
        %v636 = vadd.f32 %v634, %v635
        %v637 = vsel %vm397, %v618, 0.0
        %v638 = vadd.f32 %v636, %v637
        %v639 = vsel %vm397, %v619, 0.0
        %v640 = vadd.f32 %v638, %v639
        %v641 = vsel %vm397, %v620, 0.0
        %v642 = vadd.f32 %v640, %v641
        %v643 = vsel %vm397, %v621, 0.0
        %v644 = vadd.f32 %v642, %v643
        %v645 = vsel %vm397, %v622, 0.0
        %v646 = vadd.f32 %v644, %v645
        %v647 = vrot.slane %v646, 4
        %v648 = vadd.f32 %v646, %v647
        %v649 = vrot.slane %v648, 2
        %v650 = vadd.f32 %v648, %v649
        %v651 = vrot.slane %v650, 1
        %v652 = vadd.f32 %v650, %v651
        %v653 = vsel %vm397, %v623, 0.0
        %v654 = vsel %vm397, %v624, 0.0
        %v655 = vadd.f32 %v653, %v654
        %v656 = vsel %vm397, %v625, 0.0
        %v657 = vadd.f32 %v655, %v656
        %v658 = vsel %vm397, %v626, 0.0
        %v659 = vadd.f32 %v657, %v658
        %v660 = vsel %vm397, %v627, 0.0
        %v661 = vadd.f32 %v659, %v660
        %v662 = vsel %vm397, %v628, 0.0
        %v663 = vadd.f32 %v661, %v662
        %v664 = vsel %vm397, %v629, 0.0
        %v665 = vadd.f32 %v663, %v664
        %v666 = vsel %vm397, %v630, 0.0
        %v667 = vadd.f32 %v665, %v666
        %v668 = vrot.slane %v667, 4
        %v669 = vadd.f32 %v667, %v668
        %v670 = vrot.slane %v669, 2
        %v671 = vadd.f32 %v669, %v670
        %v672 = vrot.slane %v671, 1
        %v673 = vadd.f32 %v671, %v672
        %vm676 = vcmask 1041409
        %v677 = vsel %vm676, %v673, %v652
        %v679 = vadd.f32 %v631, %v677
        %vm680 = vcmask 254976
        %681 = vst.msk [vmem:[#allocation2] sm:$0x3] %vm680, %v679
        // Predicated region
        $region49: #{multi_model_forward.1} parent=39 // pred_check
          %p682 = pneg %p311
        $region50: #{multi_model_forward.1} parent=39 // pred_check_branch
          %684 = sbr.rel (%p682) target = $region52
        $region51: #{multi_model_forward.1} parent=39 // pred_region
          %v685 = vld [vmem:[#allocation2] sm:$0x3]
          %v686 = vmul.f32 %v685, 0.015625
          %v687 = vpack.c.bf16 %v686, %v686
          %v688 = vld [vmem:[%s309] sm:$0xff]
          %v689 = vld [vmem:[%s309 + $0x8] sm:$0xff]
          %v690 = vld [vmem:[%s309 + $0x10] sm:$0xff]
          %v691 = vld [vmem:[%s309 + $0x18] sm:$0xff]
          %v692 = vld [vmem:[%s309 + $0x20] sm:$0xff]
          %v693 = vld [vmem:[%s309 + $0x28] sm:$0xff]
          %v694 = vld [vmem:[%s309 + $0x30] sm:$0xff]
          %v695 = vld [vmem:[%s309 + $0x38] sm:$0xff]
          %v696 = vld [vmem:[%s309 + $0x40] sm:$0xff]
          %v697 = vld [vmem:[%s309 + $0x48] sm:$0xff]
          %v698 = vld [vmem:[%s309 + $0x50] sm:$0xff]
          %v699 = vld [vmem:[%s309 + $0x58] sm:$0xff]
          %v700 = vld [vmem:[%s309 + $0x60] sm:$0xff]
          %v701 = vld [vmem:[%s309 + $0x68] sm:$0xff]
          %v702 = vld [vmem:[%s309 + $0x70] sm:$0xff]
          %v703 = vld [vmem:[%s309 + $0x78] sm:$0xff]
          %v704 = vld [vmem:[%s309 + $0x80] sm:$0xff]
          %v705 = vld [vmem:[%s309 + $0x88] sm:$0xff]
          %v706 = vld [vmem:[%s309 + $0x90] sm:$0xff]
          %v707 = vld [vmem:[%s309 + $0x98] sm:$0xff]
          %v728 = vunpack.c.l.b16 %v688
          %v729 = vunpack.c.h.b16 %v688
          %v730 = vunpack.c.l.b16 %v689
          %v731 = vunpack.c.h.b16 %v689
          %v732 = vunpack.c.l.b16 %v690
          %v733 = vunpack.c.h.b16 %v690
          %v734 = vunpack.c.l.b16 %v691
          %v735 = vunpack.c.h.b16 %v691
          %v736 = vunpack.c.l.b16 %v692
          %v737 = vunpack.c.h.b16 %v692
          %v738 = vunpack.c.l.b16 %v693
          %v739 = vunpack.c.h.b16 %v693
          %v740 = vunpack.c.l.b16 %v694
          %v741 = vunpack.c.h.b16 %v694
          %v742 = vunpack.c.l.b16 %v695
          %v743 = vunpack.c.h.b16 %v695
          %v744 = vunpack.c.l.b16 %v696
          %v745 = vunpack.c.h.b16 %v696
          %v746 = vunpack.c.l.b16 %v697
          %v747 = vunpack.c.h.b16 %v697
          %v748 = vunpack.c.l.b16 %v698
          %v749 = vunpack.c.h.b16 %v698
          %v750 = vunpack.c.l.b16 %v699
          %v751 = vunpack.c.h.b16 %v699
          %v752 = vunpack.c.l.b16 %v700
          %v753 = vunpack.c.h.b16 %v700
          %v754 = vunpack.c.l.b16 %v701
          %v755 = vunpack.c.h.b16 %v701
          %v756 = vunpack.c.l.b16 %v702
          %v757 = vunpack.c.h.b16 %v702
          %v758 = vunpack.c.l.b16 %v703
          %v759 = vunpack.c.h.b16 %v703
          %v760 = vunpack.c.l.b16 %v704
          %v761 = vunpack.c.h.b16 %v704
          %v762 = vunpack.c.l.b16 %v705
          %v763 = vunpack.c.h.b16 %v705
          %v764 = vunpack.c.l.b16 %v706
          %v765 = vunpack.c.h.b16 %v706
          %v766 = vunpack.c.l.b16 %v707
          %v767 = vunpack.c.h.b16 %v707
          %v768 = vpack.c.b16 %v738, %v728
          %v769 = vpack.c.b16 %v739, %v729
          %v770 = vpack.c.b16 %v740, %v730
          %v771 = vpack.c.b16 %v741, %v731
          %v772 = vpack.c.b16 %v742, %v732
          %v773 = vpack.c.b16 %v743, %v733
          %v774 = vpack.c.b16 %v744, %v734
          %v775 = vpack.c.b16 %v745, %v735
          %v776 = vpack.c.b16 %v746, %v736
          %v777 = vpack.c.b16 %v747, %v737
          %v778 = vpack.c.b16 %v758, %v748
          %v779 = vpack.c.b16 %v759, %v749
          %v780 = vpack.c.b16 %v760, %v750
          %v781 = vpack.c.b16 %v761, %v751
          %v782 = vpack.c.b16 %v762, %v752
          %v783 = vpack.c.b16 %v763, %v753
          %v784 = vpack.c.b16 %v764, %v754
          %v785 = vpack.c.b16 %v765, %v755
          %v786 = vpack.c.b16 %v766, %v756
          %v787 = vpack.c.b16 %v767, %v757
          %v809 = vsel %vm397, %v687, 0
          %811 = vmatprep.subr.bf16.mxu0 %v769
          %812 = vmatpush1.bf16.msra.mxu0 %v768
          %813 = vmatprep.subr.bf16.mxu0 %v779
          %814 = vmatpush1.bf16.msra.mxu0 %v778
          %815 = vmatprep.subr.bf16.mxu0 0
          %816 = vmatpush1.bf16.msra.mxu0 0
          %817 = vmatprep.subr.bf16.mxu0 0
          %818 = vmatpush1.bf16.msra.mxu0 0
          %819 = vmatprep.subr.bf16.mxu0 0
          %820 = vmatpush1.bf16.msra.mxu0 0
          %821 = vmatprep.subr.bf16.mxu0 0
          %822 = vmatpush1.bf16.msra.mxu0 0
          %823 = vmatprep.subr.bf16.mxu0 0
          %824 = vmatpush1.bf16.msra.mxu0 0
          %825 = vmatprep.subr.bf16.mxu0 0
          %826 = vmatpush1.bf16.msra.mxu0 0
          %827 = vmatprep.subr.bf16.mxu0 0
          %828 = vmatpush1.bf16.msra.mxu0 0
          %829 = vmatprep.subr.bf16.mxu0 0
          %830 = vmatpush1.bf16.msra.mxu0 0
          %831 = vmatprep.subr.bf16.mxu0 0
          %832 = vmatpush1.bf16.msra.mxu0 0
          %833 = vmatprep.subr.bf16.mxu0 0
          %834 = vmatpush1.bf16.msra.mxu0 0
          %835 = vmatprep.subr.bf16.mxu0 0
          %836 = vmatpush1.bf16.msra.mxu0 0
          %837 = vmatprep.subr.bf16.mxu0 0
          %838 = vmatpush1.bf16.msra.mxu0 0
          %839 = vmatprep.subr.bf16.mxu0 0
          %840 = vmatpush1.bf16.msra.mxu0 0
          %841 = vmatprep.subr.bf16.mxu0 0
          %842 = vmatpush1.bf16.msra.mxu0 0
          %843 = vmatprep.mubr.bf16.mxu0 0
          %844 = vmatmul.mubr.bf16.gmra.mrb[0].mxu0 %v809
          %v845 = vpop.f32.mrb[0].mxu0
          %v846 = vadd.f32 0.0, %v845
          %v847 = vpop.f32.mrb[0].mxu0
          %v848 = vadd.f32 0.0, %v847
          %v849 = vpop.f32.mrb[0].mxu0
          %v850 = vpop.f32.mrb[0].mxu0
          %851 = vdwg.mxu0
          %852 = vmatprep.subr.bf16.mxu0 %v771
          %853 = vmatpush1.bf16.msra.mxu0 %v770
          %854 = vmatprep.subr.bf16.mxu0 %v781
          %855 = vmatpush1.bf16.msra.mxu0 %v780
          %856 = vmatprep.subr.bf16.mxu0 0
          %857 = vmatpush1.bf16.msra.mxu0 0
          %858 = vmatprep.subr.bf16.mxu0 0
          %859 = vmatpush1.bf16.msra.mxu0 0
          %860 = vmatprep.subr.bf16.mxu0 0
          %861 = vmatpush1.bf16.msra.mxu0 0
          %862 = vmatprep.subr.bf16.mxu0 0
          %863 = vmatpush1.bf16.msra.mxu0 0
          %864 = vmatprep.subr.bf16.mxu0 0
          %865 = vmatpush1.bf16.msra.mxu0 0
          %866 = vmatprep.subr.bf16.mxu0 0
          %867 = vmatpush1.bf16.msra.mxu0 0
          %868 = vmatprep.subr.bf16.mxu0 0
          %869 = vmatpush1.bf16.msra.mxu0 0
          %870 = vmatprep.subr.bf16.mxu0 0
          %871 = vmatpush1.bf16.msra.mxu0 0
          %872 = vmatprep.subr.bf16.mxu0 0
          %873 = vmatpush1.bf16.msra.mxu0 0
          %874 = vmatprep.subr.bf16.mxu0 0
          %875 = vmatpush1.bf16.msra.mxu0 0
          %876 = vmatprep.subr.bf16.mxu0 0
          %877 = vmatpush1.bf16.msra.mxu0 0
          %878 = vmatprep.subr.bf16.mxu0 0
          %879 = vmatpush1.bf16.msra.mxu0 0
          %880 = vmatprep.subr.bf16.mxu0 0
          %881 = vmatpush1.bf16.msra.mxu0 0
          %882 = vmatprep.subr.bf16.mxu0 0
          %883 = vmatpush1.bf16.msra.mxu0 0
          %884 = vmatprep.mubr.bf16.mxu0 0
          %885 = vmatmul.mubr.bf16.gmra.mrb[0].mxu0 %v809
          %v886 = vpop.f32.mrb[0].mxu0
          %v887 = vadd.f32 0.0, %v886
          %v888 = vpop.f32.mrb[0].mxu0
          %v889 = vadd.f32 0.0, %v888
          %v890 = vpop.f32.mrb[0].mxu0
          %v891 = vpop.f32.mrb[0].mxu0
          %892 = vdwg.mxu0
          %893 = vmatprep.subr.bf16.mxu0 %v773
          %894 = vmatpush1.bf16.msra.mxu0 %v772
          %895 = vmatprep.subr.bf16.mxu0 %v783
          %896 = vmatpush1.bf16.msra.mxu0 %v782
          %897 = vmatprep.subr.bf16.mxu0 0
          %898 = vmatpush1.bf16.msra.mxu0 0
          %899 = vmatprep.subr.bf16.mxu0 0
          %900 = vmatpush1.bf16.msra.mxu0 0
          %901 = vmatprep.subr.bf16.mxu0 0
          %902 = vmatpush1.bf16.msra.mxu0 0
          %903 = vmatprep.subr.bf16.mxu0 0
          %904 = vmatpush1.bf16.msra.mxu0 0
          %905 = vmatprep.subr.bf16.mxu0 0
          %906 = vmatpush1.bf16.msra.mxu0 0
          %907 = vmatprep.subr.bf16.mxu0 0
          %908 = vmatpush1.bf16.msra.mxu0 0
          %909 = vmatprep.subr.bf16.mxu0 0
          %910 = vmatpush1.bf16.msra.mxu0 0
          %911 = vmatprep.subr.bf16.mxu0 0
          %912 = vmatpush1.bf16.msra.mxu0 0
          %913 = vmatprep.subr.bf16.mxu0 0
          %914 = vmatpush1.bf16.msra.mxu0 0
          %915 = vmatprep.subr.bf16.mxu0 0
          %916 = vmatpush1.bf16.msra.mxu0 0
          %917 = vmatprep.subr.bf16.mxu0 0
          %918 = vmatpush1.bf16.msra.mxu0 0
          %919 = vmatprep.subr.bf16.mxu0 0
          %920 = vmatpush1.bf16.msra.mxu0 0
          %921 = vmatprep.subr.bf16.mxu0 0
          %922 = vmatpush1.bf16.msra.mxu0 0
          %923 = vmatprep.subr.bf16.mxu0 0
          %924 = vmatpush1.bf16.msra.mxu0 0
          %925 = vmatprep.mubr.bf16.mxu0 0
          %926 = vmatmul.mubr.bf16.gmra.mrb[0].mxu0 %v809
          %v927 = vpop.f32.mrb[0].mxu0
          %v928 = vadd.f32 0.0, %v927
          %v929 = vpop.f32.mrb[0].mxu0
          %v930 = vadd.f32 0.0, %v929
          %v931 = vpop.f32.mrb[0].mxu0
          %v932 = vpop.f32.mrb[0].mxu0
          %933 = vdwg.mxu0
          %934 = vmatprep.subr.bf16.mxu0 %v775
          %935 = vmatpush1.bf16.msra.mxu0 %v774
          %936 = vmatprep.subr.bf16.mxu0 %v785
          %937 = vmatpush1.bf16.msra.mxu0 %v784
          %938 = vmatprep.subr.bf16.mxu0 0
          %939 = vmatpush1.bf16.msra.mxu0 0
          %940 = vmatprep.subr.bf16.mxu0 0
          %941 = vmatpush1.bf16.msra.mxu0 0
          %942 = vmatprep.subr.bf16.mxu0 0
          %943 = vmatpush1.bf16.msra.mxu0 0
          %944 = vmatprep.subr.bf16.mxu0 0
          %945 = vmatpush1.bf16.msra.mxu0 0
          %946 = vmatprep.subr.bf16.mxu0 0
          %947 = vmatpush1.bf16.msra.mxu0 0
          %948 = vmatprep.subr.bf16.mxu0 0
          %949 = vmatpush1.bf16.msra.mxu0 0
          %950 = vmatprep.subr.bf16.mxu0 0
          %951 = vmatpush1.bf16.msra.mxu0 0
          %952 = vmatprep.subr.bf16.mxu0 0
          %953 = vmatpush1.bf16.msra.mxu0 0
          %954 = vmatprep.subr.bf16.mxu0 0
          %955 = vmatpush1.bf16.msra.mxu0 0
          %956 = vmatprep.subr.bf16.mxu0 0
          %957 = vmatpush1.bf16.msra.mxu0 0
          %958 = vmatprep.subr.bf16.mxu0 0
          %959 = vmatpush1.bf16.msra.mxu0 0
          %960 = vmatprep.subr.bf16.mxu0 0
          %961 = vmatpush1.bf16.msra.mxu0 0
          %962 = vmatprep.subr.bf16.mxu0 0
          %963 = vmatpush1.bf16.msra.mxu0 0
          %964 = vmatprep.subr.bf16.mxu0 0
          %965 = vmatpush1.bf16.msra.mxu0 0
          %966 = vmatprep.mubr.bf16.mxu0 0
          %967 = vmatmul.mubr.bf16.gmra.mrb[0].mxu0 %v809
          %v968 = vpop.f32.mrb[0].mxu0
          %v969 = vadd.f32 0.0, %v968
          %v970 = vpop.f32.mrb[0].mxu0
          %v971 = vadd.f32 0.0, %v970
          %v972 = vpop.f32.mrb[0].mxu0
          %v973 = vpop.f32.mrb[0].mxu0
          %974 = vdwg.mxu0
          %975 = vmatprep.subr.bf16.mxu0 %v777
          %976 = vmatpush1.bf16.msra.mxu0 %v776
          %977 = vmatprep.subr.bf16.mxu0 %v787
          %978 = vmatpush1.bf16.msra.mxu0 %v786
          %979 = vmatprep.subr.bf16.mxu0 0
          %980 = vmatpush1.bf16.msra.mxu0 0
          %981 = vmatprep.subr.bf16.mxu0 0
          %982 = vmatpush1.bf16.msra.mxu0 0
          %983 = vmatprep.subr.bf16.mxu0 0
          %984 = vmatpush1.bf16.msra.mxu0 0
          %985 = vmatprep.subr.bf16.mxu0 0
          %986 = vmatpush1.bf16.msra.mxu0 0
          %987 = vmatprep.subr.bf16.mxu0 0
          %988 = vmatpush1.bf16.msra.mxu0 0
          %989 = vmatprep.subr.bf16.mxu0 0
          %990 = vmatpush1.bf16.msra.mxu0 0
          %991 = vmatprep.subr.bf16.mxu0 0
          %992 = vmatpush1.bf16.msra.mxu0 0
          %993 = vmatprep.subr.bf16.mxu0 0
          %994 = vmatpush1.bf16.msra.mxu0 0
          %995 = vmatprep.subr.bf16.mxu0 0
          %996 = vmatpush1.bf16.msra.mxu0 0
          %997 = vmatprep.subr.bf16.mxu0 0
          %998 = vmatpush1.bf16.msra.mxu0 0
          %999 = vmatprep.subr.bf16.mxu0 0
          %1000 = vmatpush1.bf16.msra.mxu0 0
          %1001 = vmatprep.subr.bf16.mxu0 0
          %1002 = vmatpush1.bf16.msra.mxu0 0
          %1003 = vmatprep.subr.bf16.mxu0 0
          %1004 = vmatpush1.bf16.msra.mxu0 0
          %1005 = vmatprep.subr.bf16.mxu0 0
          %1006 = vmatpush1.bf16.msra.mxu0 0
          %1007 = vmatprep.mubr.bf16.mxu0 0
          %1008 = vmatmul.mubr.bf16.gmra.mrb[0].mxu0 %v809
          %v1009 = vpop.f32.mrb[0].mxu0
          %v1010 = vadd.f32 0.0, %v1009
          %v1011 = vpop.f32.mrb[0].mxu0
          %v1012 = vadd.f32 0.0, %v1011
          %v1013 = vpop.f32.mrb[0].mxu0
          %v1014 = vpop.f32.mrb[0].mxu0
          %1015 = vdwg.mxu0
          %v1016 = vld [vmem:[#allocation3] sm:$0xff]
          %v1017 = vld [vmem:[#allocation3 + $0x8] sm:$0xff]
          %v1018 = vld [vmem:[#allocation3 + $0x10] sm:$0xf]
          %v1019 = vxor.u32 %v846, 2147483648
          %v1020 = vxor.u32 %v848, 2147483648
          %v1021 = vxor.u32 %v887, 2147483648
          %v1022 = vxor.u32 %v889, 2147483648
          %v1023 = vxor.u32 %v928, 2147483648
          %v1024 = vxor.u32 %v930, 2147483648
          %v1025 = vxor.u32 %v969, 2147483648
          %v1026 = vxor.u32 %v971, 2147483648
          %v1027 = vxor.u32 %v1010, 2147483648
          %v1028 = vxor.u32 %v1012, 2147483648
          %v1029 = vmul.f32 %v1019, 1.442695
          %v1030 = vpow.pop %v1029
          %v1031 = vmul.f32 %v1020, 1.442695
          %v1032 = vpow.pop %v1031
          %v1033 = vmul.f32 %v1021, 1.442695
          %v1034 = vpow.pop %v1033
          %v1035 = vmul.f32 %v1022, 1.442695
          %v1036 = vpow.pop %v1035
          %v1037 = vmul.f32 %v1023, 1.442695
          %v1038 = vpow.pop %v1037
          %v1039 = vmul.f32 %v1024, 1.442695
          %v1040 = vpow.pop %v1039
          %v1041 = vmul.f32 %v1025, 1.442695
          %v1042 = vpow.pop %v1041
          %v1043 = vmul.f32 %v1026, 1.442695
          %v1044 = vpow.pop %v1043
          %v1045 = vmul.f32 %v1027, 1.442695
          %v1046 = vpow.pop %v1045
          %v1047 = vmul.f32 %v1028, 1.442695
          %v1048 = vpow.pop %v1047
          %v1049 = vadd.f32 %v1030, 1.0
          %v1050 = vadd.f32 %v1032, 1.0
          %v1051 = vadd.f32 %v1034, 1.0
          %v1052 = vadd.f32 %v1036, 1.0
          %v1053 = vadd.f32 %v1038, 1.0
          %v1054 = vadd.f32 %v1040, 1.0
          %v1055 = vadd.f32 %v1042, 1.0
          %v1056 = vadd.f32 %v1044, 1.0
          %v1057 = vadd.f32 %v1046, 1.0
          %v1058 = vadd.f32 %v1048, 1.0
          %v1059 = vrcp.pop %v1049
          %v1060 = vmul.f32 1.0, %v1059
          %v1061 = vrcp.pop %v1050
          %v1062 = vmul.f32 1.0, %v1061
          %v1063 = vrcp.pop %v1051
          %v1064 = vmul.f32 1.0, %v1063
          %v1065 = vrcp.pop %v1052
          %v1066 = vmul.f32 1.0, %v1065
          %v1067 = vrcp.pop %v1053
          %v1068 = vmul.f32 1.0, %v1067
          %v1069 = vrcp.pop %v1054
          %v1070 = vmul.f32 1.0, %v1069
          %v1071 = vrcp.pop %v1055
          %v1072 = vmul.f32 1.0, %v1071
          %v1073 = vrcp.pop %v1056
          %v1074 = vmul.f32 1.0, %v1073
          %v1075 = vrcp.pop %v1057
          %v1076 = vmul.f32 1.0, %v1075
          %v1077 = vrcp.pop %v1058
          %v1078 = vmul.f32 1.0, %v1077
          %v1079 = vmul.f32 %v846, %v1060
          %v1080 = vmul.f32 %v848, %v1062
          %v1081 = vmul.f32 %v887, %v1064
          %v1082 = vmul.f32 %v889, %v1066
          %v1083 = vmul.f32 %v928, %v1068
          %v1084 = vmul.f32 %v930, %v1070
          %v1085 = vmul.f32 %v969, %v1072
          %v1086 = vmul.f32 %v971, %v1074
          %v1087 = vmul.f32 %v1010, %v1076
          %v1088 = vmul.f32 %v1012, %v1078
          %v1099 = vcombine.low %v1079, %v1080
          %v1100 = vcombine.low %v1081, %v1082
          %v1102 = vunpack.c.l.s4 1983009808
          %v1103 = vunpack.c.0.s8 %v1102
          %v1104 = vlaneseq
          %v1105 = vshrl.u32 %v1104, 7
          %v1106 = vsub.s32 %v1103, %v1105
          %v1107 = vrot.slane %v1099, %v1106
          %v1109 = vunpack.c.l.s4 1983009808
          %v1110 = vunpack.c.0.s8 %v1109
          %v1111 = vlaneseq
          %v1112 = vshrl.u32 %v1111, 7
          %v1113 = vsub.s32 %v1110, %v1112
          %v1114 = vrot.slane %v1100, %v1113
          %v1115 = vcombine.low %v1107, %v1114
          %v1116 = vcombine.low %v1083, %v1084
          %v1117 = vcombine.low %v1085, %v1086
          %v1119 = vunpack.c.l.s4 1983009808
          %v1120 = vunpack.c.0.s8 %v1119
          %v1121 = vlaneseq
          %v1122 = vshrl.u32 %v1121, 7
          %v1123 = vsub.s32 %v1120, %v1122
          %v1124 = vrot.slane %v1116, %v1123
          %v1126 = vunpack.c.l.s4 1983009808
          %v1127 = vunpack.c.0.s8 %v1126
          %v1128 = vlaneseq
          %v1129 = vshrl.u32 %v1128, 7
          %v1130 = vsub.s32 %v1127, %v1129
          %v1131 = vrot.slane %v1117, %v1130
          %v1132 = vcombine.low %v1124, %v1131
          %v1133 = vcombine.low %v1087, %v1088
          %v1135 = vunpack.c.l.s4 1983009808
          %v1136 = vunpack.c.0.s8 %v1135
          %v1137 = vlaneseq
          %v1138 = vshrl.u32 %v1137, 7
          %v1139 = vsub.s32 %v1136, %v1138
          %v1140 = vrot.slane %v1133, %v1139
          %v1144 = vadd.f32 %v1016, %v1115
          %v1145 = vadd.f32 %v1017, %v1132
          %v1146 = vadd.f32 %v1018, %v1140
          %1147 = vst [vmem:[#allocation3] sm:$0xff] %v1144
          %1148 = vst [vmem:[#allocation3 + $0x8] sm:$0xff] %v1145
          %1149 = vst [vmem:[#allocation3 + $0x10] sm:$0xf] %v1146
        $region52: #{multi_model_forward.1} parent=39 // pred_fallthru
          _
        %p1150 = scmp.eq.s32.totalorder %s23, 2
        %p1151 = pnand %p1150, %p311
        %p1152 = pneg %p1151
        // Predicated region
        $region53: #{multi_model_forward.1} parent=39 // pred_check
          _
        $region54: #{multi_model_forward.1} parent=39 // pred_check_branch
          %1154 = sbr.rel (%p1151) target = $region56
        $region55: #{multi_model_forward.1} parent=39 // pred_region
          %v1155 = vld [vmem:[#allocation3] sm:$0xff]
          %v1156 = vld [vmem:[#allocation3 + $0x8] sm:$0xff]
          %v1157 = vld [vmem:[#allocation3 + $0x10] sm:$0xf]
          %v1158 = vld [vmem:[%s3] sm:$0xff]
          %v1159 = vld [vmem:[%s3 + $0x8] sm:$0xff]
          %v1160 = vld [vmem:[%s3 + $0x10] sm:$0xff]
          %v1161 = vld [vmem:[%s3 + $0x18] sm:$0xff]
          %v1162 = vld [vmem:[%s3 + $0x20] sm:$0xff]
          %v1163 = vld [vmem:[%s3 + $0x28] sm:$0xff]
          %v1164 = vld [vmem:[%s3 + $0x30] sm:$0xff]
          %v1165 = vld [vmem:[%s3 + $0x38] sm:$0xff]
          %v1166 = vld [vmem:[%s3 + $0x40] sm:$0xff]
          %v1167 = vld [vmem:[%s3 + $0x48] sm:$0xff]
          %v1168 = vld [vmem:[%s3 + $0x50] sm:$0xff]
          %v1169 = vld [vmem:[%s3 + $0x58] sm:$0xff]
          %v1170 = vld [vmem:[%s3 + $0x60] sm:$0xff]
          %v1171 = vld [vmem:[%s3 + $0x68] sm:$0xff]
          %v1172 = vld [vmem:[%s3 + $0x70] sm:$0xff]
          %v1173 = vld [vmem:[%s3 + $0x78] sm:$0xff]
          %v1174 = vld [vmem:[%s3 + $0x80] sm:$0xff]
          %v1175 = vld [vmem:[%s3 + $0x88] sm:$0xff]
          %v1176 = vld [vmem:[%s3 + $0x90] sm:$0xff]
          %v1177 = vld [vmem:[%s3 + $0x98] sm:$0xff]
          %v1178 = vld [vmem:[%s3 + $0xa0] sm:$0xff]
          %v1179 = vld [vmem:[%s3 + $0xa8] sm:$0xff]
          %v1180 = vld [vmem:[%s3 + $0xb0] sm:$0xff]
          %v1181 = vld [vmem:[%s3 + $0xb8] sm:$0xff]
          %v1182 = vld [vmem:[%s3 + $0xc0] sm:$0xff]
          %v1183 = vld [vmem:[%s3 + $0xc8] sm:$0xff]
          %v1184 = vld [vmem:[%s3 + $0xd0] sm:$0xff]
          %v1185 = vld [vmem:[%s3 + $0xd8] sm:$0xff]
          %v1186 = vld [vmem:[%s3 + $0xe0] sm:$0xff]
          %v1187 = vld [vmem:[%s3 + $0xe8] sm:$0xff]
          %v1188 = vld [vmem:[%s3 + $0xf0] sm:$0xff]
          %v1189 = vld [vmem:[%s3 + $0xf8] sm:$0xff]
          %v1190 = vld [vmem:[%s3 + $0x100] sm:$0xff]
          %v1191 = vld [vmem:[%s3 + $0x108] sm:$0xff]
          %v1192 = vld [vmem:[%s3 + $0x110] sm:$0xff]
          %v1193 = vld [vmem:[%s3 + $0x118] sm:$0xff]
          %v1194 = vld [vmem:[%s3 + $0x120] sm:$0xff]
          %v1195 = vld [vmem:[%s3 + $0x128] sm:$0xff]
          %v1196 = vld [vmem:[%s3 + $0x130] sm:$0xff]
          %v1197 = vld [vmem:[%s3 + $0x138] sm:$0xff]
          %v1198 = vld [vmem:[%s3 + $0x140] sm:$0xff]
          %v1199 = vld [vmem:[%s3 + $0x148] sm:$0xff]
          %v1200 = vld [vmem:[%s3 + $0x150] sm:$0xff]
          %v1201 = vld [vmem:[%s3 + $0x158] sm:$0xff]
          %v1202 = vld [vmem:[%s3 + $0x160] sm:$0xff]
          %v1203 = vld [vmem:[%s3 + $0x168] sm:$0xff]
          %v1204 = vld [vmem:[%s3 + $0x170] sm:$0xff]
          %v1205 = vld [vmem:[%s3 + $0x178] sm:$0xff]
          %v1206 = vld [vmem:[%s3 + $0x180] sm:$0xff]
          %v1207 = vld [vmem:[%s3 + $0x188] sm:$0xff]
          %v1208 = vld [vmem:[%s3 + $0x190] sm:$0xff]
          %v1209 = vld [vmem:[%s3 + $0x198] sm:$0xff]
          %v1210 = vld [vmem:[%s3 + $0x1a0] sm:$0xff]
          %v1211 = vld [vmem:[%s3 + $0x1a8] sm:$0xff]
          %v1212 = vld [vmem:[%s3 + $0x1b0] sm:$0xff]
          %v1213 = vld [vmem:[%s3 + $0x1b8] sm:$0xff]
          %v1214 = vld [vmem:[%s3 + $0x1c0] sm:$0xff]
          %v1215 = vld [vmem:[%s3 + $0x1c8] sm:$0xff]
          %v1216 = vld [vmem:[%s3 + $0x1d0] sm:$0xff]
          %v1217 = vld [vmem:[%s3 + $0x1d8] sm:$0xff]
          %v1218 = vld [vmem:[%s3 + $0x1e0] sm:$0xff]
          %v1219 = vld [vmem:[%s3 + $0x1e8] sm:$0xff]
          %v1220 = vld [vmem:[%s3 + $0x1f0] sm:$0xff]
          %v1221 = vld [vmem:[%s3 + $0x1f8] sm:$0xff]
          %v1222 = vld [vmem:[%s3 + $0x200] sm:$0xff]
          %v1223 = vld [vmem:[%s3 + $0x208] sm:$0xff]
          %v1224 = vld [vmem:[%s3 + $0x210] sm:$0xff]
          %v1225 = vld [vmem:[%s3 + $0x218] sm:$0xff]
          %v1226 = vld [vmem:[%s3 + $0x220] sm:$0xff]
          %v1227 = vld [vmem:[%s3 + $0x228] sm:$0xff]
          %v1228 = vld [vmem:[%s3 + $0x230] sm:$0xff]
          %v1229 = vld [vmem:[%s3 + $0x238] sm:$0xff]
          %v1230 = vld [vmem:[%s3 + $0x240] sm:$0xff]
          %v1231 = vld [vmem:[%s3 + $0x248] sm:$0xff]
          %v1232 = vld [vmem:[%s3 + $0x250] sm:$0xff]
          %v1233 = vld [vmem:[%s3 + $0x258] sm:$0xff]
          %v1234 = vld [vmem:[%s3 + $0x260] sm:$0xff]
          %v1235 = vld [vmem:[%s3 + $0x268] sm:$0xff]
          %v1236 = vld [vmem:[%s3 + $0x270] sm:$0xff]
          %v1237 = vld [vmem:[%s3 + $0x278] sm:$0xff]
          %v1238 = vld [vmem:[%s3 + $0x280] sm:$0xff]
          %v1239 = vld [vmem:[%s3 + $0x288] sm:$0xff]
          %v1240 = vld [vmem:[%s3 + $0x290] sm:$0xff]
          %v1241 = vld [vmem:[%s3 + $0x298] sm:$0xff]
          %v1242 = vld [vmem:[%s3 + $0x2a0] sm:$0xff]
          %v1243 = vld [vmem:[%s3 + $0x2a8] sm:$0xff]
          %v1244 = vld [vmem:[%s3 + $0x2b0] sm:$0xff]
          %v1245 = vld [vmem:[%s3 + $0x2b8] sm:$0xff]
          %v1246 = vld [vmem:[%s3 + $0x2c0] sm:$0xff]
          %v1247 = vld [vmem:[%s3 + $0x2c8] sm:$0xff]
          %v1248 = vld [vmem:[%s3 + $0x2d0] sm:$0xff]
          %v1249 = vld [vmem:[%s3 + $0x2d8] sm:$0xff]
          %v1250 = vld [vmem:[%s3 + $0x2e0] sm:$0xff]
          %v1251 = vld [vmem:[%s3 + $0x2e8] sm:$0xff]
          %v1252 = vld [vmem:[%s3 + $0x2f0] sm:$0xff]
          %v1253 = vld [vmem:[%s3 + $0x2f8] sm:$0xff]
          %v1254 = vld [vmem:[%s3 + $0x300] sm:$0xff]
          %v1255 = vld [vmem:[%s3 + $0x308] sm:$0xff]
          %v1256 = vld [vmem:[%s3 + $0x310] sm:$0xff]
          %v1257 = vld [vmem:[%s3 + $0x318] sm:$0xff]
          %v1258 = vld [vmem:[%s3 + $0x320] sm:$0xff]
          %v1259 = vld [vmem:[%s3 + $0x328] sm:$0xff]
          %v1260 = vld [vmem:[%s3 + $0x330] sm:$0xff]
          %v1261 = vld [vmem:[%s3 + $0x338] sm:$0xff]
          %v1262 = vld [vmem:[%s3 + $0x340] sm:$0xff]
          %v1263 = vld [vmem:[%s3 + $0x348] sm:$0xff]
          %v1264 = vld [vmem:[%s3 + $0x350] sm:$0xff]
          %v1265 = vld [vmem:[%s3 + $0x358] sm:$0xff]
          %v1266 = vld [vmem:[%s3 + $0x360] sm:$0xff]
          %v1267 = vld [vmem:[%s3 + $0x368] sm:$0xff]
          %v1268 = vld [vmem:[%s3 + $0x370] sm:$0xff]
          %v1269 = vld [vmem:[%s3 + $0x378] sm:$0xff]
          %v1270 = vld [vmem:[%s3 + $0x380] sm:$0xff]
          %v1271 = vld [vmem:[%s3 + $0x388] sm:$0xff]
          %v1272 = vld [vmem:[%s3 + $0x390] sm:$0xff]
          %v1273 = vld [vmem:[%s3 + $0x398] sm:$0xff]
          %v1274 = vld [vmem:[%s3 + $0x3a0] sm:$0xff]
          %v1275 = vld [vmem:[%s3 + $0x3a8] sm:$0xff]
          %v1276 = vld [vmem:[%s3 + $0x3b0] sm:$0xff]
          %v1277 = vld [vmem:[%s3 + $0x3b8] sm:$0xff]
          %v1278 = vld [vmem:[%s3 + $0x3c0] sm:$0xff]
          %v1279 = vld [vmem:[%s3 + $0x3c8] sm:$0xff]
          %v1280 = vld [vmem:[%s3 + $0x3d0] sm:$0xff]
          %v1281 = vld [vmem:[%s3 + $0x3d8] sm:$0xff]
          %v1282 = vld [vmem:[%s3 + $0x3e0] sm:$0xff]
          %v1283 = vld [vmem:[%s3 + $0x3e8] sm:$0xff]
          %v1284 = vld [vmem:[%s3 + $0x3f0] sm:$0xff]
          %v1285 = vld [vmem:[%s3 + $0x3f8] sm:$0xff]
          %v1286 = vld [vmem:[%s3 + $0x400] sm:$0xff]
          %v1287 = vld [vmem:[%s3 + $0x408] sm:$0xff]
          %v1288 = vld [vmem:[%s3 + $0x410] sm:$0xff]
          %v1289 = vld [vmem:[%s3 + $0x418] sm:$0xff]
          %v1290 = vld [vmem:[%s3 + $0x420] sm:$0xff]
          %v1291 = vld [vmem:[%s3 + $0x428] sm:$0xff]
          %v1292 = vld [vmem:[%s3 + $0x430] sm:$0xff]
          %v1293 = vld [vmem:[%s3 + $0x438] sm:$0xff]
          %v1294 = vld [vmem:[%s3 + $0x440] sm:$0xff]
          %v1295 = vld [vmem:[%s3 + $0x448] sm:$0xff]
          %v1296 = vld [vmem:[%s3 + $0x450] sm:$0xff]
          %v1297 = vld [vmem:[%s3 + $0x458] sm:$0xff]
          %v1298 = vld [vmem:[%s3 + $0x460] sm:$0xff]
          %v1299 = vld [vmem:[%s3 + $0x468] sm:$0xff]
          %v1300 = vld [vmem:[%s3 + $0x470] sm:$0xff]
          %v1301 = vld [vmem:[%s3 + $0x478] sm:$0xff]
          %v1302 = vld [vmem:[%s3 + $0x480] sm:$0xff]
          %v1303 = vld [vmem:[%s3 + $0x488] sm:$0xff]
          %v1304 = vld [vmem:[%s3 + $0x490] sm:$0xff]
          %v1305 = vld [vmem:[%s3 + $0x498] sm:$0xff]
          %v1306 = vld [vmem:[%s3 + $0x4a0] sm:$0xff]
          %v1307 = vld [vmem:[%s3 + $0x4a8] sm:$0xff]
          %v1308 = vld [vmem:[%s3 + $0x4b0] sm:$0xff]
          %v1309 = vld [vmem:[%s3 + $0x4b8] sm:$0xff]
          %v1310 = vld [vmem:[%s3 + $0x4c0] sm:$0xff]
          %v1311 = vld [vmem:[%s3 + $0x4c8] sm:$0xff]
          %v1312 = vld [vmem:[%s3 + $0x4d0] sm:$0xff]
          %v1313 = vld [vmem:[%s3 + $0x4d8] sm:$0xff]
          %v1314 = vld [vmem:[%s3 + $0x4e0] sm:$0xff]
          %v1315 = vld [vmem:[%s3 + $0x4e8] sm:$0xff]
          %v1316 = vld [vmem:[%s3 + $0x4f0] sm:$0xff]
          %v1317 = vld [vmem:[%s3 + $0x4f8] sm:$0xff]
          %v1318 = vld [vmem:[%s4] sm:$0x1]
          %v1320 = vlaneseq
          %v1321 = vshrl.u32 %v1320, 7
          %v1322 = vsub.s32 0, %v1321
          %v1323 = vrot.slane %v1318, %v1322
          %v1328 = vcombine.high %v1155, %v1155
          %v1330 = vunpack.c.l.s4 1983009808
          %v1331 = vunpack.c.0.s8 %v1330
          %v1332 = vlaneseq
          %v1333 = vshrl.u32 %v1332, 7
          %v1334 = vsub.s32 %v1331, %v1333
          %v1335 = vrot.slane %v1155, %v1334
          %v1337 = vunpack.c.l.s4 1983009808
          %v1338 = vunpack.c.0.s8 %v1337
          %v1339 = vlaneseq
          %v1340 = vshrl.u32 %v1339, 7
          %v1341 = vsub.s32 %v1338, %v1340
          %v1342 = vrot.slane %v1328, %v1341
          %v1343 = vcombine.high %v1335, %v1335
          %v1344 = vcombine.high %v1342, %v1342
          %v1345 = vcombine.high %v1156, %v1156
          %v1347 = vunpack.c.l.s4 1983009808
          %v1348 = vunpack.c.0.s8 %v1347
          %v1349 = vlaneseq
          %v1350 = vshrl.u32 %v1349, 7
          %v1351 = vsub.s32 %v1348, %v1350
          %v1352 = vrot.slane %v1156, %v1351
          %v1354 = vunpack.c.l.s4 1983009808
          %v1355 = vunpack.c.0.s8 %v1354
          %v1356 = vlaneseq
          %v1357 = vshrl.u32 %v1356, 7
          %v1358 = vsub.s32 %v1355, %v1357
          %v1359 = vrot.slane %v1345, %v1358
          %v1360 = vcombine.high %v1352, %v1352
          %v1361 = vcombine.high %v1359, %v1359
          %v1363 = vunpack.c.l.s4 1983009808
          %v1364 = vunpack.c.0.s8 %v1363
          %v1365 = vlaneseq
          %v1366 = vshrl.u32 %v1365, 7
          %v1367 = vsub.s32 %v1364, %v1366
          %v1368 = vrot.slane %v1157, %v1367
          %v1369 = vcombine.high %v1368, %v1368
          %1380 = vmatprep.subr.mxu0 0.0
          %1381 = vmatpush1.msra.mxu0 %v1158
          %1382 = vmatprep.subr.mxu0 0.0
          %1383 = vmatpush1.msra.mxu0 %v1159
          %1384 = vmatprep.subr.mxu0 0.0
          %1385 = vmatpush1.msra.mxu0 %v1160
          %1386 = vmatprep.subr.mxu0 0.0
          %1387 = vmatpush1.msra.mxu0 %v1161
          %1388 = vmatprep.subr.mxu0 0.0
          %1389 = vmatpush1.msra.mxu0 %v1162
          %1390 = vmatprep.subr.mxu0 0.0
          %1391 = vmatpush1.msra.mxu0 %v1163
          %1392 = vmatprep.subr.mxu0 0.0
          %1393 = vmatpush1.msra.mxu0 %v1164
          %1394 = vmatprep.subr.mxu0 0.0
          %1395 = vmatpush1.msra.mxu0 %v1165
          %1396 = vmatprep.subr.mxu0 0.0
          %1397 = vmatpush1.msra.mxu0 %v1166
          %1398 = vmatprep.subr.mxu0 0.0
          %1399 = vmatpush1.msra.mxu0 %v1167
          %1400 = vmatprep.subr.mxu0 0.0
          %1401 = vmatpush1.msra.mxu0 %v1168
          %1402 = vmatprep.subr.mxu0 0.0
          %1403 = vmatpush1.msra.mxu0 %v1169
          %1404 = vmatprep.subr.mxu0 0.0
          %1405 = vmatpush1.msra.mxu0 %v1170
          %1406 = vmatprep.subr.mxu0 0.0
          %1407 = vmatpush1.msra.mxu0 %v1171
          %1408 = vmatprep.subr.mxu0 0.0
          %1409 = vmatpush1.msra.mxu0 %v1172
          %1410 = vmatprep.subr.mxu0 0.0
          %1411 = vmatpush1.msra.mxu0 %v1173
          %1412 = vmatprep.subr.mxu0 0.0
          %1413 = vmatpush1.msra.mxu0 %v1174
          %1414 = vmatprep.subr.mxu0 0.0
          %1415 = vmatpush1.msra.mxu0 %v1175
          %1416 = vmatprep.subr.mxu0 0.0
          %1417 = vmatpush1.msra.mxu0 %v1176
          %1418 = vmatprep.subr.mxu0 0.0
          %1419 = vmatpush1.msra.mxu0 %v1177
          %1420 = vmatprep.subr.mxu0 0.0
          %1421 = vmatpush1.msra.mxu0 %v1178
          %1422 = vmatprep.subr.mxu0 0.0
          %1423 = vmatpush1.msra.mxu0 %v1179
          %1424 = vmatprep.subr.mxu0 0.0
          %1425 = vmatpush1.msra.mxu0 %v1180
          %1426 = vmatprep.subr.mxu0 0.0
          %1427 = vmatpush1.msra.mxu0 %v1181
          %1428 = vmatprep.subr.mxu0 0.0
          %1429 = vmatpush1.msra.mxu0 %v1182
          %1430 = vmatprep.subr.mxu0 0.0
          %1431 = vmatpush1.msra.mxu0 %v1183
          %1432 = vmatprep.subr.mxu0 0.0
          %1433 = vmatpush1.msra.mxu0 %v1184
          %1434 = vmatprep.subr.mxu0 0.0
          %1435 = vmatpush1.msra.mxu0 %v1185
          %1436 = vmatprep.subr.mxu0 0.0
          %1437 = vmatpush1.msra.mxu0 %v1186
          %1438 = vmatprep.subr.mxu0 0.0
          %1439 = vmatpush1.msra.mxu0 %v1187
          %1440 = vmatprep.subr.mxu0 0.0
          %1441 = vmatpush1.msra.mxu0 %v1188
          %1442 = vmatprep.subr.mxu0 0.0
          %1443 = vmatpush1.msra.mxu0 %v1189
          %1444 = vmatprep.mubr.f32.mxu0 %v1343
          %1445 = vmatmul.mubr.f32.gmra.mrb[0].mxu0 %v1335
          %v1446 = vpop.f32.mrb[0].mxu0
          %v1447 = vadd.f32 %v1323, %v1446
          %v1448 = vpop.f32.mrb[0].mxu0
          %1449 = vdwg.mxu0
          %1450 = vmatprep.subr.mxu0 0.0
          %1451 = vmatpush1.msra.mxu0 %v1190
          %1452 = vmatprep.subr.mxu0 0.0
          %1453 = vmatpush1.msra.mxu0 %v1191
          %1454 = vmatprep.subr.mxu0 0.0
          %1455 = vmatpush1.msra.mxu0 %v1192
          %1456 = vmatprep.subr.mxu0 0.0
          %1457 = vmatpush1.msra.mxu0 %v1193
          %1458 = vmatprep.subr.mxu0 0.0
          %1459 = vmatpush1.msra.mxu0 %v1194
          %1460 = vmatprep.subr.mxu0 0.0
          %1461 = vmatpush1.msra.mxu0 %v1195
          %1462 = vmatprep.subr.mxu0 0.0
          %1463 = vmatpush1.msra.mxu0 %v1196
          %1464 = vmatprep.subr.mxu0 0.0
          %1465 = vmatpush1.msra.mxu0 %v1197
          %1466 = vmatprep.subr.mxu0 0.0
          %1467 = vmatpush1.msra.mxu0 %v1198
          %1468 = vmatprep.subr.mxu0 0.0
          %1469 = vmatpush1.msra.mxu0 %v1199
          %1470 = vmatprep.subr.mxu0 0.0
          %1471 = vmatpush1.msra.mxu0 %v1200
          %1472 = vmatprep.subr.mxu0 0.0
          %1473 = vmatpush1.msra.mxu0 %v1201
          %1474 = vmatprep.subr.mxu0 0.0
          %1475 = vmatpush1.msra.mxu0 %v1202
          %1476 = vmatprep.subr.mxu0 0.0
          %1477 = vmatpush1.msra.mxu0 %v1203
          %1478 = vmatprep.subr.mxu0 0.0
          %1479 = vmatpush1.msra.mxu0 %v1204
          %1480 = vmatprep.subr.mxu0 0.0
          %1481 = vmatpush1.msra.mxu0 %v1205
          %1482 = vmatprep.subr.mxu0 0.0
          %1483 = vmatpush1.msra.mxu0 %v1206
          %1484 = vmatprep.subr.mxu0 0.0
          %1485 = vmatpush1.msra.mxu0 %v1207
          %1486 = vmatprep.subr.mxu0 0.0
          %1487 = vmatpush1.msra.mxu0 %v1208
          %1488 = vmatprep.subr.mxu0 0.0
          %1489 = vmatpush1.msra.mxu0 %v1209
          %1490 = vmatprep.subr.mxu0 0.0
          %1491 = vmatpush1.msra.mxu0 %v1210
          %1492 = vmatprep.subr.mxu0 0.0
          %1493 = vmatpush1.msra.mxu0 %v1211
          %1494 = vmatprep.subr.mxu0 0.0
          %1495 = vmatpush1.msra.mxu0 %v1212
          %1496 = vmatprep.subr.mxu0 0.0
          %1497 = vmatpush1.msra.mxu0 %v1213
          %1498 = vmatprep.subr.mxu0 0.0
          %1499 = vmatpush1.msra.mxu0 %v1214
          %1500 = vmatprep.subr.mxu0 0.0
          %1501 = vmatpush1.msra.mxu0 %v1215
          %1502 = vmatprep.subr.mxu0 0.0
          %1503 = vmatpush1.msra.mxu0 %v1216
          %1504 = vmatprep.subr.mxu0 0.0
          %1505 = vmatpush1.msra.mxu0 %v1217
          %1506 = vmatprep.subr.mxu0 0.0
          %1507 = vmatpush1.msra.mxu0 %v1218
          %1508 = vmatprep.subr.mxu0 0.0
          %1509 = vmatpush1.msra.mxu0 %v1219
          %1510 = vmatprep.subr.mxu0 0.0
          %1511 = vmatpush1.msra.mxu0 %v1220
          %1512 = vmatprep.subr.mxu0 0.0
          %1513 = vmatpush1.msra.mxu0 %v1221
          %1514 = vmatprep.mubr.f32.mxu0 %v1344
          %1515 = vmatmul.mubr.f32.gmra.mrb[0].mxu0 %v1342
          %v1516 = vpop.f32.mrb[0].mxu0
          %v1517 = vadd.f32 %v1447, %v1516
          %v1518 = vpop.f32.mrb[0].mxu0
          %1519 = vdwg.mxu0
          %1520 = vmatprep.subr.mxu0 0.0
          %1521 = vmatpush1.msra.mxu0 %v1222
          %1522 = vmatprep.subr.mxu0 0.0
          %1523 = vmatpush1.msra.mxu0 %v1223
          %1524 = vmatprep.subr.mxu0 0.0
          %1525 = vmatpush1.msra.mxu0 %v1224
          %1526 = vmatprep.subr.mxu0 0.0
          %1527 = vmatpush1.msra.mxu0 %v1225
          %1528 = vmatprep.subr.mxu0 0.0
          %1529 = vmatpush1.msra.mxu0 %v1226
          %1530 = vmatprep.subr.mxu0 0.0
          %1531 = vmatpush1.msra.mxu0 %v1227
          %1532 = vmatprep.subr.mxu0 0.0
          %1533 = vmatpush1.msra.mxu0 %v1228
          %1534 = vmatprep.subr.mxu0 0.0
          %1535 = vmatpush1.msra.mxu0 %v1229
          %1536 = vmatprep.subr.mxu0 0.0
          %1537 = vmatpush1.msra.mxu0 %v1230
          %1538 = vmatprep.subr.mxu0 0.0
          %1539 = vmatpush1.msra.mxu0 %v1231
          %1540 = vmatprep.subr.mxu0 0.0
          %1541 = vmatpush1.msra.mxu0 %v1232
          %1542 = vmatprep.subr.mxu0 0.0
          %1543 = vmatpush1.msra.mxu0 %v1233
          %1544 = vmatprep.subr.mxu0 0.0
          %1545 = vmatpush1.msra.mxu0 %v1234
          %1546 = vmatprep.subr.mxu0 0.0
          %1547 = vmatpush1.msra.mxu0 %v1235
          %1548 = vmatprep.subr.mxu0 0.0
          %1549 = vmatpush1.msra.mxu0 %v1236
          %1550 = vmatprep.subr.mxu0 0.0
          %1551 = vmatpush1.msra.mxu0 %v1237
          %1552 = vmatprep.subr.mxu0 0.0
          %1553 = vmatpush1.msra.mxu0 %v1238
          %1554 = vmatprep.subr.mxu0 0.0
          %1555 = vmatpush1.msra.mxu0 %v1239
          %1556 = vmatprep.subr.mxu0 0.0
          %1557 = vmatpush1.msra.mxu0 %v1240
          %1558 = vmatprep.subr.mxu0 0.0
          %1559 = vmatpush1.msra.mxu0 %v1241
          %1560 = vmatprep.subr.mxu0 0.0
          %1561 = vmatpush1.msra.mxu0 %v1242
          %1562 = vmatprep.subr.mxu0 0.0
          %1563 = vmatpush1.msra.mxu0 %v1243
          %1564 = vmatprep.subr.mxu0 0.0
          %1565 = vmatpush1.msra.mxu0 %v1244
          %1566 = vmatprep.subr.mxu0 0.0
          %1567 = vmatpush1.msra.mxu0 %v1245
          %1568 = vmatprep.subr.mxu0 0.0
          %1569 = vmatpush1.msra.mxu0 %v1246
          %1570 = vmatprep.subr.mxu0 0.0
          %1571 = vmatpush1.msra.mxu0 %v1247
          %1572 = vmatprep.subr.mxu0 0.0
          %1573 = vmatpush1.msra.mxu0 %v1248
          %1574 = vmatprep.subr.mxu0 0.0
          %1575 = vmatpush1.msra.mxu0 %v1249
          %1576 = vmatprep.subr.mxu0 0.0
          %1577 = vmatpush1.msra.mxu0 %v1250
          %1578 = vmatprep.subr.mxu0 0.0
          %1579 = vmatpush1.msra.mxu0 %v1251
          %1580 = vmatprep.subr.mxu0 0.0
          %1581 = vmatpush1.msra.mxu0 %v1252
          %1582 = vmatprep.subr.mxu0 0.0
          %1583 = vmatpush1.msra.mxu0 %v1253
          %1584 = vmatprep.mubr.f32.mxu0 %v1360
          %1585 = vmatmul.mubr.f32.gmra.mrb[0].mxu0 %v1352
          %v1586 = vpop.f32.mrb[0].mxu0
          %v1587 = vadd.f32 %v1517, %v1586
          %v1588 = vpop.f32.mrb[0].mxu0
          %1589 = vdwg.mxu0
          %1590 = vmatprep.subr.mxu0 0.0
          %1591 = vmatpush1.msra.mxu0 %v1254
          %1592 = vmatprep.subr.mxu0 0.0
          %1593 = vmatpush1.msra.mxu0 %v1255
          %1594 = vmatprep.subr.mxu0 0.0
          %1595 = vmatpush1.msra.mxu0 %v1256
          %1596 = vmatprep.subr.mxu0 0.0
          %1597 = vmatpush1.msra.mxu0 %v1257
          %1598 = vmatprep.subr.mxu0 0.0
          %1599 = vmatpush1.msra.mxu0 %v1258
          %1600 = vmatprep.subr.mxu0 0.0
          %1601 = vmatpush1.msra.mxu0 %v1259
          %1602 = vmatprep.subr.mxu0 0.0
          %1603 = vmatpush1.msra.mxu0 %v1260
          %1604 = vmatprep.subr.mxu0 0.0
          %1605 = vmatpush1.msra.mxu0 %v1261
          %1606 = vmatprep.subr.mxu0 0.0
          %1607 = vmatpush1.msra.mxu0 %v1262
          %1608 = vmatprep.subr.mxu0 0.0
          %1609 = vmatpush1.msra.mxu0 %v1263
          %1610 = vmatprep.subr.mxu0 0.0
          %1611 = vmatpush1.msra.mxu0 %v1264
          %1612 = vmatprep.subr.mxu0 0.0
          %1613 = vmatpush1.msra.mxu0 %v1265
          %1614 = vmatprep.subr.mxu0 0.0
          %1615 = vmatpush1.msra.mxu0 %v1266
          %1616 = vmatprep.subr.mxu0 0.0
          %1617 = vmatpush1.msra.mxu0 %v1267
          %1618 = vmatprep.subr.mxu0 0.0
          %1619 = vmatpush1.msra.mxu0 %v1268
          %1620 = vmatprep.subr.mxu0 0.0
          %1621 = vmatpush1.msra.mxu0 %v1269
          %1622 = vmatprep.subr.mxu0 0.0
          %1623 = vmatpush1.msra.mxu0 %v1270
          %1624 = vmatprep.subr.mxu0 0.0
          %1625 = vmatpush1.msra.mxu0 %v1271
          %1626 = vmatprep.subr.mxu0 0.0
          %1627 = vmatpush1.msra.mxu0 %v1272
          %1628 = vmatprep.subr.mxu0 0.0
          %1629 = vmatpush1.msra.mxu0 %v1273
          %1630 = vmatprep.subr.mxu0 0.0
          %1631 = vmatpush1.msra.mxu0 %v1274
          %1632 = vmatprep.subr.mxu0 0.0
          %1633 = vmatpush1.msra.mxu0 %v1275
          %1634 = vmatprep.subr.mxu0 0.0
          %1635 = vmatpush1.msra.mxu0 %v1276
          %1636 = vmatprep.subr.mxu0 0.0
          %1637 = vmatpush1.msra.mxu0 %v1277
          %1638 = vmatprep.subr.mxu0 0.0
          %1639 = vmatpush1.msra.mxu0 %v1278
          %1640 = vmatprep.subr.mxu0 0.0
          %1641 = vmatpush1.msra.mxu0 %v1279
          %1642 = vmatprep.subr.mxu0 0.0
          %1643 = vmatpush1.msra.mxu0 %v1280
          %1644 = vmatprep.subr.mxu0 0.0
          %1645 = vmatpush1.msra.mxu0 %v1281
          %1646 = vmatprep.subr.mxu0 0.0
          %1647 = vmatpush1.msra.mxu0 %v1282
          %1648 = vmatprep.subr.mxu0 0.0
          %1649 = vmatpush1.msra.mxu0 %v1283
          %1650 = vmatprep.subr.mxu0 0.0
          %1651 = vmatpush1.msra.mxu0 %v1284
          %1652 = vmatprep.subr.mxu0 0.0
          %1653 = vmatpush1.msra.mxu0 %v1285
          %1654 = vmatprep.mubr.f32.mxu0 %v1361
          %1655 = vmatmul.mubr.f32.gmra.mrb[0].mxu0 %v1359
          %v1656 = vpop.f32.mrb[0].mxu0
          %v1657 = vadd.f32 %v1587, %v1656
          %v1658 = vpop.f32.mrb[0].mxu0
          %1659 = vdwg.mxu0
          %1660 = vmatprep.subr.mxu0 0.0
          %1661 = vmatpush1.msra.mxu0 %v1286
          %1662 = vmatprep.subr.mxu0 0.0
          %1663 = vmatpush1.msra.mxu0 %v1287
          %1664 = vmatprep.subr.mxu0 0.0
          %1665 = vmatpush1.msra.mxu0 %v1288
          %1666 = vmatprep.subr.mxu0 0.0
          %1667 = vmatpush1.msra.mxu0 %v1289
          %1668 = vmatprep.subr.mxu0 0.0
          %1669 = vmatpush1.msra.mxu0 %v1290
          %1670 = vmatprep.subr.mxu0 0.0
          %1671 = vmatpush1.msra.mxu0 %v1291
          %1672 = vmatprep.subr.mxu0 0.0
          %1673 = vmatpush1.msra.mxu0 %v1292
          %1674 = vmatprep.subr.mxu0 0.0
          %1675 = vmatpush1.msra.mxu0 %v1293
          %1676 = vmatprep.subr.mxu0 0.0
          %1677 = vmatpush1.msra.mxu0 %v1294
          %1678 = vmatprep.subr.mxu0 0.0
          %1679 = vmatpush1.msra.mxu0 %v1295
          %1680 = vmatprep.subr.mxu0 0.0
          %1681 = vmatpush1.msra.mxu0 %v1296
          %1682 = vmatprep.subr.mxu0 0.0
          %1683 = vmatpush1.msra.mxu0 %v1297
          %1684 = vmatprep.subr.mxu0 0.0
          %1685 = vmatpush1.msra.mxu0 %v1298
          %1686 = vmatprep.subr.mxu0 0.0
          %1687 = vmatpush1.msra.mxu0 %v1299
          %1688 = vmatprep.subr.mxu0 0.0
          %1689 = vmatpush1.msra.mxu0 %v1300
          %1690 = vmatprep.subr.mxu0 0.0
          %1691 = vmatpush1.msra.mxu0 %v1301
          %1692 = vmatprep.subr.mxu0 0.0
          %1693 = vmatpush1.msra.mxu0 %v1302
          %1694 = vmatprep.subr.mxu0 0.0
          %1695 = vmatpush1.msra.mxu0 %v1303
          %1696 = vmatprep.subr.mxu0 0.0
          %1697 = vmatpush1.msra.mxu0 %v1304
          %1698 = vmatprep.subr.mxu0 0.0
          %1699 = vmatpush1.msra.mxu0 %v1305
          %1700 = vmatprep.subr.mxu0 0.0
          %1701 = vmatpush1.msra.mxu0 %v1306
          %1702 = vmatprep.subr.mxu0 0.0
          %1703 = vmatpush1.msra.mxu0 %v1307
          %1704 = vmatprep.subr.mxu0 0.0
          %1705 = vmatpush1.msra.mxu0 %v1308
          %1706 = vmatprep.subr.mxu0 0.0
          %1707 = vmatpush1.msra.mxu0 %v1309
          %1708 = vmatprep.subr.mxu0 0.0
          %1709 = vmatpush1.msra.mxu0 %v1310
          %1710 = vmatprep.subr.mxu0 0.0
          %1711 = vmatpush1.msra.mxu0 %v1311
          %1712 = vmatprep.subr.mxu0 0.0
          %1713 = vmatpush1.msra.mxu0 %v1312
          %1714 = vmatprep.subr.mxu0 0.0
          %1715 = vmatpush1.msra.mxu0 %v1313
          %1716 = vmatprep.subr.mxu0 0.0
          %1717 = vmatpush1.msra.mxu0 %v1314
          %1718 = vmatprep.subr.mxu0 0.0
          %1719 = vmatpush1.msra.mxu0 %v1315
          %1720 = vmatprep.subr.mxu0 0.0
          %1721 = vmatpush1.msra.mxu0 %v1316
          %1722 = vmatprep.subr.mxu0 0.0
          %1723 = vmatpush1.msra.mxu0 %v1317
          %1724 = vmatprep.mubr.f32.mxu0 %v1369
          %1725 = vmatmul.mubr.f32.gmra.mrb[0].mxu0 %v1368
          %v1726 = vpop.f32.mrb[0].mxu0
          %v1727 = vadd.f32 %v1657, %v1726
          %v1728 = vpop.f32.mrb[0].mxu0
          %1729 = vdwg.mxu0
          %1730 = vst [vmem:[#allocation4] sm:$0x3] %v1727
        $region56: #{multi_model_forward.1} parent=39 // pred_fallthru
          _
        // Predicated region
        $region57: #{multi_model_forward.1} parent=39 // pred_check
          %p1731 = pneg %p178
        $region58: #{multi_model_forward.1} parent=39 // pred_check_branch
          %1733 = sbr.rel (%p1731) target = $region60
        $region59: #{multi_model_forward.1} parent=39 // pred_region
          %s1735 = ssub.s32 32, 32
          %1736 = vsyncadd [#allocation5], %s1735
          %s1737 = smul.addr %s22, 32
          %s1738 = scalar_lea.hbm %s5, %s1737
          %s1740 = sshll.u32 [#allocation4], 4
          %s1741 = int_to_ptr.vmem [resolvable:$true] %s1740
          %1743 = dma.vmem_to_hbm [thread:$0]  %s1741, 32, %s1738, [#allocation5]
        $region60: #{multi_model_forward.1} parent=39 // pred_fallthru
          _
        // Predicated region
        $region61: #{multi_model_forward.1} parent=39 // pred_check
          %p1744 = pneg %p178
        $region62: #{multi_model_forward.1} parent=39 // pred_check_branch
          %1746 = sbr.rel (%p1744) target = $region64
        $region63: #{multi_model_forward.1} parent=39 // pred_region
          %1747 = dma.done [#allocation5], 32
        $region64: #{multi_model_forward.1} parent=39 // pred_fallthru
          _
      $region40: #{multi_model_forward.1} parent=5 // pred_fallthru
        _
      %p1748 = scmp.le.s32.totalorder 2, %s12
      // Predicated region
      $region65: #{multi_model_forward.1} parent=5 // pred_check
        %p1749 = pneg %p1748
      $region66: #{multi_model_forward.1} parent=5 // pred_check_branch
        %1751 = sbr.rel (%p1749) target = $region68
      $region67: #{multi_model_forward.1} parent=5 // pred_region
        %s1752 = ssub.s32 %s12, 2
      $region68: #{multi_model_forward.1} parent=5 // pred_fallthru
        _
    $region6: #{multi_model_forward.1} parent=1 // loop_footer
      %s16 = sadd.s32 1, %s12
    $region7: #{multi_model_forward.1} parent=1 // loop_footer_branch
      %11 = sbr.rel target = $region3
    $region8: #{multi_model_forward.1} parent=1 // loop_exit
      _
    %1753 = vsyncpa [#allocation5], 1
    %s1754 = scalar_lea.sflag [#allocation5], 1
    %1755 = vsyncpa %s1754, 1

</llo_original>
